<compile_context>
chip_gen: v7x
topology: tpu7x:2x2x1
jax: 0.10.0
libtpu: 0.0.40
codegen_flags: <defaults>
</compile_context>

<pallas_src>
import math

import jax
import jax.numpy as jnp
from jax.experimental import pallas as pl
from jax.experimental.pallas import tpu as pltpu


# ---------------------------------------------------------------------------
# Shared elementwise helpers (Python-literal constants only, so nothing is
# captured by the kernel closure as a traced constant).
# ---------------------------------------------------------------------------
def _leaky_relu(x, slope=0.2):
    return jnp.maximum(x, slope * x)


def _layer_norm(x, gamma, beta, eps=1e-5):
    mean = jnp.mean(x, axis=-1, keepdims=True)
    centered = x - mean
    var = jnp.mean(centered * centered, axis=-1, keepdims=True)
    inv = jax.lax.rsqrt(var + eps)          # EUP rsqrt, no sqrt+divide on the VPU
    return centered * inv * gamma + beta


def _sigmoid(x):
    # Numerically stable sigmoid via tanh (EUP); identical in kernel and reference.
    return 0.5 * (jnp.tanh(0.5 * x) + 1.0)


# ---------------------------------------------------------------------------
# The fused discriminator kernel (single invocation, no grid).
# ---------------------------------------------------------------------------
def _discriminator_kernel(
    x_ref,                      # [B, din+1]  f32   (features | cgr)
    t_ref,                      # [din, K*D]  bf16  MinibatchDiscrimination T
    g_ref,                      # [K*D, K]    bf16  0/1 kernel-grouping matrix
    w0f_ref, w0m_ref,           # [din,256] / [K,256] bf16 split first linear
    rows256_ref,                # [8, 256] f32: b0, ln0_g, ln0_b, br0, lnr0_g, lnr0_b, w0c, pad
    wr0_ref,                    # [256, 256] bf16  ResidualBlock(256) weight
    w1_ref,                     # [256, 128] bf16  second spectral-norm linear
    rows128_ref,                # [8, 128] f32: b1, ln1_g, ln1_b, br1, lnr1_g, lnr1_b, b_heads, pad
    wr1_ref,                    # [128, 128] bf16  ResidualBlock(128) weight
    wh_ref,                     # [128, 128] bf16  fused heads (cols 0..dout-1 = matched, col 127 = validity)
    out_ref,                    # [B, 128]  f32    lane-dense output slab
):
    bf16 = jnp.bfloat16
    f32 = jnp.float32

    x = x_ref[...]
    b = x.shape[0]
    din = x.shape[1] - 1
    feat = x[:, :din]
    cgr = x[:, din:din + 1]
    feat_bf = feat.astype(bf16)

    # ---- MinibatchDiscrimination (vectorized, no loop, no scratch) -------------
    m = jnp.dot(feat_bf, t_ref[...], preferred_element_type=f32)      # [B, K*D]
    nkd = m.shape[1]
    nk = g_ref.shape[1]
    diff = jnp.abs(m[:, None, :] - m[None, :, :])                     # [B, B, K*D]
    diff = diff.reshape(b * b, nkd).astype(bf16)                      # one slab
    dist = jnp.dot(diff, g_ref[...], preferred_element_type=f32)      # [B*B, K]
    mb = jnp.sum(jnp.exp(-dist).reshape(b, b, nk), axis=0)            # [B, K]

    # ---- packed scalar rows -----------------------------------------------------
    b0 = rows256_ref[0:1, :]
    ln0_g = rows256_ref[1:2, :]
    ln0_b = rows256_ref[2:3, :]
    br0 = rows256_ref[3:4, :]
    lnr0_g = rows256_ref[4:5, :]
    lnr0_b = rows256_ref[5:6, :]
    w0c = rows256_ref[6:7, :]

    b1 = rows128_ref[0:1, :]
    ln1_g = rows128_ref[1:2, :]
    ln1_b = rows128_ref[2:3, :]
    br1 = rows128_ref[3:4, :]
    lnr1_g = rows128_ref[4:5, :]
    lnr1_b = rows128_ref[5:6, :]
    b_heads = rows128_ref[6:7, :]

    # ---- combined = [features | mb | cgr] @ W0^T + b0, split so the concat never
    # materializes; the single cgr column is a rank-1 VPU outer product.
    h = jnp.dot(feat_bf, w0f_ref[...], preferred_element_type=f32)
    h = h + jnp.dot(mb.astype(bf16), w0m_ref[...], preferred_element_type=f32)
    h = h + cgr * w0c + b0
    h = _layer_norm(_leaky_relu(h), ln0_g, ln0_b)
    # Dropout(0.2): identity in inference mode.
    # TODO(synk): training-mode dropout would need pltpu.prng_* masks.

    # ---- ResidualBlock(256): x + 0.1 * LayerNorm(LeakyReLU(Linear(x)))
    r = jnp.dot(h.astype(bf16), wr0_ref[...], preferred_element_type=f32) + br0
    h = h + 0.1 * _layer_norm(_leaky_relu(r), lnr0_g, lnr0_b)

    # ---- spectral_norm(Linear(256, 128)) + LeakyReLU + LayerNorm
    h = jnp.dot(h.astype(bf16), w1_ref[...], preferred_element_type=f32) + b1
    h = _layer_norm(_leaky_relu(h), ln1_g, ln1_b)

    # ---- ResidualBlock(128)
    r = jnp.dot(h.astype(bf16), wr1_ref[...], preferred_element_type=f32) + br1
    h = h + 0.1 * _layer_norm(_leaky_relu(r), lnr1_g, lnr1_b)

    # ---- fused heads: one MXU push, one unmasked 128-lane store.
    # Columns [0, dout) hold the feature-matching head; column 127 holds the
    # validity logit (sigmoid applied via a lane select, everything else passes
    # through unchanged).
    out = jnp.dot(h.astype(bf16), wh_ref[...], preferred_element_type=f32) + b_heads
    col = jax.lax.broadcasted_iota(jnp.int32, out.shape, 1)
    out_ref[...] = jnp.where(col == (out.shape[1] - 1), _sigmoid(out), out)


# ---------------------------------------------------------------------------
# Host-side (once-per-weight-update) preprocessing.
# ---------------------------------------------------------------------------
def _spectral_normalize(w, n_iters=50, eps=1e-12):
    """Divide a [out, in] weight by its largest singular value (power iteration)."""
    w = jnp.asarray(w, jnp.float32)
    out_f = w.shape[0]
    u0 = jnp.full((out_f,), 1.0 / math.sqrt(out_f), jnp.float32)

    def body(_, u):
        v = w.T @ u
        v = v / (jnp.linalg.norm(v) + eps)
        u = w @ v
        u = u / (jnp.linalg.norm(u) + eps)
        return u

    u = jax.lax.fori_loop(0, n_iters, body, u0)
    v = w.T @ u
    v = v / (jnp.linalg.norm(v) + eps)
    sigma = jnp.dot(u, jnp.dot(w, v))
    return w / sigma


def prepare_params(params, num_kernels=16, kernel_dim=16,
                   weights_dtype=jnp.bfloat16):
    """Once-per-weight-update preprocessing (outside the per-step hot path):
    spectral-normalize the spectral-norm linears, pre-transpose weights to
    [in, out], split the first main linear into [features | mb | cgr] pieces,
    pack all tiny bias / LayerNorm rows into two dense slabs, fuse both heads
    into one lane-dense [128, 128] slab, and cast weight matrices to bf16."""
    f32 = jnp.float32
    din = params["T"].shape[0]
    nkd = num_kernels * kernel_dim
    dout = din + 1
    assert dout <= 127, "matched columns + validity column must fit one 128-lane slab"

    w0n = _spectral_normalize(params["w0"]).T     # [main_in, 256]
    w1n = _spectral_normalize(params["w1"]).T     # [256, 128]
    wvn = _spectral_normalize(params["wv"])       # [1, 128]
    wfn = _spectral_normalize(params["wf"]).T     # [128, dout]

    # Fused heads: columns [0, dout) = feature_matching, column 127 = validity.
    w_heads = jnp.zeros((w1n.shape[1], 128), f32)
    w_heads = w_heads.at[:, :dout].set(wfn)
    w_heads = w_heads.at[:, 127].set(wvn[0])
    b_heads = jnp.zeros((128,), f32)
    b_heads = b_heads.at[:dout].set(jnp.asarray(params["bf"], f32))
    b_heads = b_heads.at[127].set(jnp.asarray(params["bv"], f32)[0])

    # 0/1 kernel-grouping matrix for the per-kernel L1 distance reduction.
    row_kernel = jnp.arange(nkd, dtype=jnp.int32) // kernel_dim
    g = (row_kernel[:, None] ==
         jnp.arange(num_kernels, dtype=jnp.int32)[None, :]).astype(f32)

    def stack_rows(rows, width):
        slab = jnp.zeros((8, width), f32)
        for i, r in enumerate(rows):
            slab = slab.at[i, :].set(jnp.asarray(r, f32).reshape(-1))
        return slab

    rows256 = stack_rows(
        [params["b0"], params["ln0_g"], params["ln0_b"],
         params["br0"], params["lnr0_g"], params["lnr0_b"],
         w0n[din + num_kernels]],                 # w0c column (cgr) as a row
        256)
    rows128 = stack_rows(
        [params["b1"], params["ln1_g"], params["ln1_b"],
         params["br1"], params["lnr1_g"], params["lnr1_b"],
         b_heads],
        128)

    wd = weights_dtype
    return dict(
        t=jnp.asarray(params["T"], f32).astype(wd),
        g=g.astype(wd),
        w0f=w0n[:din].astype(wd),
        w0m=w0n[din:din + num_kernels].astype(wd),
        rows256=rows256,
        wr0=jnp.asarray(params["wr0"], f32).T.astype(wd),
        w1=w1n.astype(wd),
        rows128=rows128,
        wr1=jnp.asarray(params["wr1"], f32).T.astype(wd),
        w_heads=w_heads.astype(wd),
    )


def _full_block(a):
    nd = a.ndim
    return pl.BlockSpec(a.shape, lambda: (0,) * nd)


@jax.jit
def discriminator_forward(x, prep):
    """Fused EnhancedDLPIMDiscriminator forward as a single pallas_call."""
    x = x.astype(jnp.float32)
    b, xin = x.shape
    din = xin - 1
    dout = din + 1
    nkd, nk = prep["g"].shape
    h0 = prep["rows256"].shape[1]
    h1 = prep["rows128"].shape[1]

    args = (x, prep["t"], prep["g"], prep["w0f"], prep["w0m"], prep["rows256"],
            prep["wr0"], prep["w1"], prep["rows128"], prep["wr1"],
            prep["w_heads"])

    flops = (2 * b * din * nkd                    # features @ T
             + b * b * nkd                        # pairwise |diff|
             + 2 * b * b * nkd * nk               # grouped L1 distance matmul
             + 2 * b * (din + nk) * h0            # main linear 0 (split)
             + 2 * b * h0 * h0                    # residual block 0
             + 2 * b * h0 * h1                    # main linear 1
             + 2 * b * h1 * h1                    # residual block 1
             + 2 * b * h1 * 128)                  # fused heads
    transcendentals = b * b * nk + 4 * b + b * 128    # exp (mb), rsqrt (LN), tanh
    bytes_accessed = (sum(int(a.size) * a.dtype.itemsize for a in args)
                      + b * 128 * 4)

    out_slab = pl.pallas_call(
        _discriminator_kernel,
        out_shape=jax.ShapeDtypeStruct((b, 128), jnp.float32),
        in_specs=[_full_block(a) for a in args],
        out_specs=pl.BlockSpec((b, 128), lambda: (0, 0)),
        compiler_params=pltpu.CompilerParams(
            vmem_limit_bytes=4 * 1024 * 1024),   # real footprint < 1 MiB
        cost_estimate=pl.CostEstimate(flops=int(flops),
                                      transcendentals=int(transcendentals),
                                      bytes_accessed=int(bytes_accessed)),
    )(*args)

    matched = out_slab[:, :dout]
    validity = out_slab[:, -1:]
    return validity, matched


# ---------------------------------------------------------------------------
# Parameter init (mimics the PyTorch module) and a pure-jnp reference.
# ---------------------------------------------------------------------------
def init_params(key, input_dim, num_kernels=16, kernel_dim=16):
    ks = jax.random.split(key, 8)

    def kaiming(k, out_f, in_f):
        std = math.sqrt(2.0 / in_f)   # kaiming_normal, fan_in, leaky_relu
        return std * jax.random.normal(k, (out_f, in_f), dtype=jnp.float32)

    main_in = input_dim + num_kernels + 1
    zeros = lambda n: jnp.zeros((n,), jnp.float32)
    ones = lambda n: jnp.ones((n,), jnp.float32)
    return {
        "T": jax.random.normal(ks[0], (input_dim, num_kernels * kernel_dim),
                               dtype=jnp.float32),
        "w0": kaiming(ks[1], 256, main_in), "b0": zeros(256),
        "ln0_g": ones(256), "ln0_b": zeros(256),
        "wr0": kaiming(ks[2], 256, 256), "br0": zeros(256),
        "lnr0_g": ones(256), "lnr0_b": zeros(256),
        "w1": kaiming(ks[3], 128, 256), "b1": zeros(128),
        "ln1_g": ones(128), "ln1_b": zeros(128),
        "wr1": kaiming(ks[4], 128, 128), "br1": zeros(128),
        "lnr1_g": ones(128), "lnr1_b": zeros(128),
        "wv": kaiming(ks[5], 1, 128), "bv": zeros(1),
        "wf": kaiming(ks[6], input_dim + 1, 128), "bf": zeros(input_dim + 1),
    }


def reference_forward(x, prep):
    """Pure-jnp reference using exactly the same preprocessed weights and the
    same bf16-input / f32-accumulate matmul discipline as the kernel."""
    f32 = jnp.float32
    x = x.astype(f32)
    b, xin = x.shape
    din = xin - 1
    dout = din + 1
    feat = x[:, :din]
    cgr = x[:, din:din + 1]

    def mm(a, w):
        return jnp.dot(a.astype(w.dtype), w, preferred_element_type=f32)

    m = mm(feat, prep["t"])                                    # [B, K*D]
    nkd = m.shape[1]
    nk = prep["g"].shape[1]
    diff = jnp.abs(m[:, None, :] - m[None, :, :]).reshape(b * b, nkd)
    dist = mm(diff, prep["g"])                                 # [B*B, K]
    mb = jnp.sum(jnp.exp(-dist).reshape(b, b, nk), axis=0)     # [B, K]

    r256 = prep["rows256"]
    b0, ln0_g, ln0_b, br0, lnr0_g, lnr0_b, w0c = (r256[i:i + 1] for i in range(7))
    r128 = prep["rows128"]
    b1, ln1_g, ln1_b, br1, lnr1_g, lnr1_b, b_heads = (r128[i:i + 1] for i in range(7))

    h = mm(feat, prep["w0f"]) + mm(mb, prep["w0m"]) + cgr * w0c + b0
    h = _layer_norm(_leaky_relu(h), ln0_g, ln0_b)
    h = h + 0.1 * _layer_norm(_leaky_relu(mm(h, prep["wr0"]) + br0), lnr0_g, lnr0_b)
    h = _layer_norm(_leaky_relu(mm(h, prep["w1"]) + b1), ln1_g, ln1_b)
    h = h + 0.1 * _layer_norm(_leaky_relu(mm(h, prep["wr1"]) + br1), lnr1_g, lnr1_b)

    out = mm(h, prep["w_heads"]) + b_heads
    matched = out[:, :dout]
    validity = _sigmoid(out[:, -1:])
    return validity, matched


if __name__ == "__main__":
    key = jax.random.PRNGKey(0)
    k_x, k_p = jax.random.split(key)

    B, input_dim = 8, 32                     # x rows are [features(32) | cgr(1)]
    x = jax.random.normal(k_x, (B, input_dim + 1), dtype=jnp.float32)
    params = init_params(k_p, input_dim)

    prep = prepare_params(params)            # once per weight update, not per step
    validity, matched = discriminator_forward(x, prep)
    validity, matched = jax.block_until_ready((validity, matched))

    ref_v, ref_m = reference_forward(x, prep)

    assert validity.shape == (B, 1)
    assert matched.shape == (B, input_dim + 1)
    assert jnp.all(jnp.isfinite(validity)) and jnp.all(jnp.isfinite(matched))
    assert jnp.allclose(validity, ref_v, atol=1e-3, rtol=1e-3), (
        f"validity max abs err {jnp.max(jnp.abs(validity - ref_v))}")
    assert jnp.allclose(matched, ref_m, atol=1e-2, rtol=1e-2), (
        f"matched max abs err {jnp.max(jnp.abs(matched - ref_m))}")

    print("KERNEL_OK")
</pallas_src>

<mosaic_0001>
module attributes {stable_mosaic.version = 11 : i64} {
  func.func @_discriminator_kernel(%arg0: memref<8x33xf32, #tpu.memory_space<vmem>>, %arg1: memref<32x256xbf16, #tpu.memory_space<vmem>>, %arg2: memref<256x16xbf16, #tpu.memory_space<vmem>>, %arg3: memref<32x256xbf16, #tpu.memory_space<vmem>>, %arg4: memref<16x256xbf16, #tpu.memory_space<vmem>>, %arg5: memref<8x256xf32, #tpu.memory_space<vmem>>, %arg6: memref<256x256xbf16, #tpu.memory_space<vmem>>, %arg7: memref<256x128xbf16, #tpu.memory_space<vmem>>, %arg8: memref<8x128xf32, #tpu.memory_space<vmem>>, %arg9: memref<128x128xbf16, #tpu.memory_space<vmem>>, %arg10: memref<128x128xbf16, #tpu.memory_space<vmem>>, %arg11: memref<8x128xf32, #tpu.memory_space<vmem>>) attributes {dimension_semantics = [], scalar_prefetch = 0 : i64, scratch_operands = 0 : i64, tpu.core_type = #tpu.core_type<tc>} {
    %c0 = arith.constant 0 : index
    %c0_0 = arith.constant 0 : index
    %0 = vector.load %arg0[%c0, %c0_0] : memref<8x33xf32, #tpu.memory_space<vmem>>, vector<8x33xf32>
    %1 = vector.extract_strided_slice %0 {offsets = [0, 0], sizes = [8, 32], strides = [1, 1]} : vector<8x33xf32> to vector<8x32xf32>
    %2 = vector.extract_strided_slice %0 {offsets = [0, 32], sizes = [8, 1], strides = [1, 1]} : vector<8x33xf32> to vector<8x1xf32>
    %3 = arith.truncf %1 : vector<8x32xf32> to vector<8x32xbf16>
    %c0_1 = arith.constant 0 : index
    %c0_2 = arith.constant 0 : index
    %4 = vector.load %arg1[%c0_1, %c0_2] : memref<32x256xbf16, #tpu.memory_space<vmem>>, vector<32x256xbf16>
    %cst = arith.constant dense<0.000000e+00> : vector<8x256xf32>
    %5 = tpu.matmul %3, %4, %cst {dimension_numbers = #tpu.dot_dimension_numbers<[1], [0], [0], [1], [0, 0, 1, 1], [], []>} : vector<8x32xbf16>, vector<32x256xbf16>, vector<8x256xf32> -> vector<8x256xf32>
    %6 = vector.shape_cast %5 : vector<8x256xf32> to vector<8x1x256xf32>
    %7 = vector.shape_cast %5 : vector<8x256xf32> to vector<1x8x256xf32>
    %8 = vector.broadcast %6 : vector<8x1x256xf32> to vector<8x8x256xf32>
    %9 = vector.broadcast %7 : vector<1x8x256xf32> to vector<8x8x256xf32>
    %10 = arith.subf %8, %9 : vector<8x8x256xf32>
    %11 = math.absf %10 : vector<8x8x256xf32>
    %12 = vector.shape_cast %11 : vector<8x8x256xf32> to vector<64x256xf32>
    %13 = arith.truncf %12 : vector<64x256xf32> to vector<64x256xbf16>
    %c0_3 = arith.constant 0 : index
    %c0_4 = arith.constant 0 : index
    %14 = vector.load %arg2[%c0_3, %c0_4] : memref<256x16xbf16, #tpu.memory_space<vmem>>, vector<256x16xbf16>
    %cst_5 = arith.constant dense<0.000000e+00> : vector<64x16xf32>
    %15 = tpu.matmul %13, %14, %cst_5 {dimension_numbers = #tpu.dot_dimension_numbers<[1], [0], [0], [1], [0, 0, 1, 1], [], []>} : vector<64x256xbf16>, vector<256x16xbf16>, vector<64x16xf32> -> vector<64x16xf32>
    %cst_6 = arith.constant 0.000000e+00 : f32
    %16 = vector.broadcast %cst_6 : f32 to vector<64x16xf32>
    %17 = arith.subf %16, %15 : vector<64x16xf32>
    %18 = math.exp %17 : vector<64x16xf32>
    %19 = vector.shape_cast %18 : vector<64x16xf32> to vector<8x8x16xf32>
    %cst_7 = arith.constant dense<0.000000e+00> : vector<8x16xf32>
    %20 = vector.multi_reduction <add>, %19, %cst_7 [0] : vector<8x8x16xf32> to vector<8x16xf32>
    %c0_8 = arith.constant 0 : index
    %c0_9 = arith.constant 0 : index
    %21 = vector.load %arg5[%c0_8, %c0_9] : memref<8x256xf32, #tpu.memory_space<vmem>>, vector<1x256xf32>
    %c1 = arith.constant 1 : index
    %c0_10 = arith.constant 0 : index
    %22 = vector.load %arg5[%c1, %c0_10] : memref<8x256xf32, #tpu.memory_space<vmem>>, vector<1x256xf32>
    %c2 = arith.constant 2 : index
    %c0_11 = arith.constant 0 : index
    %23 = vector.load %arg5[%c2, %c0_11] : memref<8x256xf32, #tpu.memory_space<vmem>>, vector<1x256xf32>
    %c3 = arith.constant 3 : index
    %c0_12 = arith.constant 0 : index
    %24 = vector.load %arg5[%c3, %c0_12] : memref<8x256xf32, #tpu.memory_space<vmem>>, vector<1x256xf32>
    %c4 = arith.constant 4 : index
    %c0_13 = arith.constant 0 : index
    %25 = vector.load %arg5[%c4, %c0_13] : memref<8x256xf32, #tpu.memory_space<vmem>>, vector<1x256xf32>
    %c5 = arith.constant 5 : index
    %c0_14 = arith.constant 0 : index
    %26 = vector.load %arg5[%c5, %c0_14] : memref<8x256xf32, #tpu.memory_space<vmem>>, vector<1x256xf32>
    %c6 = arith.constant 6 : index
    %c0_15 = arith.constant 0 : index
    %27 = vector.load %arg5[%c6, %c0_15] : memref<8x256xf32, #tpu.memory_space<vmem>>, vector<1x256xf32>
    %c0_16 = arith.constant 0 : index
    %c0_17 = arith.constant 0 : index
    %28 = vector.load %arg8[%c0_16, %c0_17] : memref<8x128xf32, #tpu.memory_space<vmem>>, vector<1x128xf32>
    %c1_18 = arith.constant 1 : index
    %c0_19 = arith.constant 0 : index
    %29 = vector.load %arg8[%c1_18, %c0_19] : memref<8x128xf32, #tpu.memory_space<vmem>>, vector<1x128xf32>
    %c2_20 = arith.constant 2 : index
    %c0_21 = arith.constant 0 : index
    %30 = vector.load %arg8[%c2_20, %c0_21] : memref<8x128xf32, #tpu.memory_space<vmem>>, vector<1x128xf32>
    %c3_22 = arith.constant 3 : index
    %c0_23 = arith.constant 0 : index
    %31 = vector.load %arg8[%c3_22, %c0_23] : memref<8x128xf32, #tpu.memory_space<vmem>>, vector<1x128xf32>
    %c4_24 = arith.constant 4 : index
    %c0_25 = arith.constant 0 : index
    %32 = vector.load %arg8[%c4_24, %c0_25] : memref<8x128xf32, #tpu.memory_space<vmem>>, vector<1x128xf32>
    %c5_26 = arith.constant 5 : index
    %c0_27 = arith.constant 0 : index
    %33 = vector.load %arg8[%c5_26, %c0_27] : memref<8x128xf32, #tpu.memory_space<vmem>>, vector<1x128xf32>
    %c6_28 = arith.constant 6 : index
    %c0_29 = arith.constant 0 : index
    %34 = vector.load %arg8[%c6_28, %c0_29] : memref<8x128xf32, #tpu.memory_space<vmem>>, vector<1x128xf32>
    %c0_30 = arith.constant 0 : index
    %c0_31 = arith.constant 0 : index
    %35 = vector.load %arg3[%c0_30, %c0_31] : memref<32x256xbf16, #tpu.memory_space<vmem>>, vector<32x256xbf16>
    %cst_32 = arith.constant dense<0.000000e+00> : vector<8x256xf32>
    %36 = tpu.matmul %3, %35, %cst_32 {dimension_numbers = #tpu.dot_dimension_numbers<[1], [0], [0], [1], [0, 0, 1, 1], [], []>} : vector<8x32xbf16>, vector<32x256xbf16>, vector<8x256xf32> -> vector<8x256xf32>
    %37 = arith.truncf %20 : vector<8x16xf32> to vector<8x16xbf16>
    %c0_33 = arith.constant 0 : index
    %c0_34 = arith.constant 0 : index
    %38 = vector.load %arg4[%c0_33, %c0_34] : memref<16x256xbf16, #tpu.memory_space<vmem>>, vector<16x256xbf16>
    %cst_35 = arith.constant dense<0.000000e+00> : vector<8x256xf32>
    %39 = tpu.matmul %37, %38, %cst_35 {dimension_numbers = #tpu.dot_dimension_numbers<[1], [0], [0], [1], [0, 0, 1, 1], [], []>} : vector<8x16xbf16>, vector<16x256xbf16>, vector<8x256xf32> -> vector<8x256xf32>
    %40 = arith.addf %36, %39 : vector<8x256xf32>
    %41 = vector.broadcast %2 : vector<8x1xf32> to vector<8x256xf32>
    %42 = vector.broadcast %27 : vector<1x256xf32> to vector<8x256xf32>
    %43 = arith.mulf %41, %42 : vector<8x256xf32>
    %44 = arith.addf %40, %43 : vector<8x256xf32>
    %45 = vector.broadcast %21 : vector<1x256xf32> to vector<8x256xf32>
    %46 = arith.addf %44, %45 : vector<8x256xf32>
    %cst_36 = arith.constant 2.000000e-01 : f32
    %47 = vector.broadcast %cst_36 : f32 to vector<8x256xf32>
    %48 = arith.mulf %47, %46 : vector<8x256xf32>
    %49 = arith.maximumf %46, %48 : vector<8x256xf32>
    %cst_37 = arith.constant dense<0.000000e+00> : vector<8xf32>
    %50 = vector.multi_reduction <add>, %49, %cst_37 [1] : vector<8x256xf32> to vector<8xf32>
    %51 = vector.shape_cast %50 : vector<8xf32> to vector<8x1xf32>
    %cst_38 = arith.constant 2.560000e+02 : f32
    %52 = vector.broadcast %cst_38 : f32 to vector<8x1xf32>
    %53 = arith.divf %51, %52 : vector<8x1xf32>
    %54 = vector.broadcast %53 : vector<8x1xf32> to vector<8x256xf32>
    %55 = arith.subf %49, %54 : vector<8x256xf32>
    %56 = arith.mulf %55, %55 : vector<8x256xf32>
    %cst_39 = arith.constant dense<0.000000e+00> : vector<8xf32>
    %57 = vector.multi_reduction <add>, %56, %cst_39 [1] : vector<8x256xf32> to vector<8xf32>
    %58 = vector.shape_cast %57 : vector<8xf32> to vector<8x1xf32>
    %cst_40 = arith.constant 2.560000e+02 : f32
    %59 = vector.broadcast %cst_40 : f32 to vector<8x1xf32>
    %60 = arith.divf %58, %59 : vector<8x1xf32>
    %cst_41 = arith.constant 9.99999974E-6 : f32
    %61 = vector.broadcast %cst_41 : f32 to vector<8x1xf32>
    %62 = arith.addf %60, %61 : vector<8x1xf32>
    %63 = math.rsqrt %62 : vector<8x1xf32>
    %64 = vector.broadcast %63 : vector<8x1xf32> to vector<8x256xf32>
    %65 = arith.mulf %55, %64 : vector<8x256xf32>
    %66 = vector.broadcast %22 : vector<1x256xf32> to vector<8x256xf32>
    %67 = arith.mulf %65, %66 : vector<8x256xf32>
    %68 = vector.broadcast %23 : vector<1x256xf32> to vector<8x256xf32>
    %69 = arith.addf %67, %68 : vector<8x256xf32>
    %70 = arith.truncf %69 : vector<8x256xf32> to vector<8x256xbf16>
    %c0_42 = arith.constant 0 : index
    %c0_43 = arith.constant 0 : index
    %71 = vector.load %arg6[%c0_42, %c0_43] : memref<256x256xbf16, #tpu.memory_space<vmem>>, vector<256x256xbf16>
    %cst_44 = arith.constant dense<0.000000e+00> : vector<8x256xf32>
    %72 = tpu.matmul %70, %71, %cst_44 {dimension_numbers = #tpu.dot_dimension_numbers<[1], [0], [0], [1], [0, 0, 1, 1], [], []>} : vector<8x256xbf16>, vector<256x256xbf16>, vector<8x256xf32> -> vector<8x256xf32>
    %73 = vector.broadcast %24 : vector<1x256xf32> to vector<8x256xf32>
    %74 = arith.addf %72, %73 : vector<8x256xf32>
    %cst_45 = arith.constant 2.000000e-01 : f32
    %75 = vector.broadcast %cst_45 : f32 to vector<8x256xf32>
    %76 = arith.mulf %75, %74 : vector<8x256xf32>
    %77 = arith.maximumf %74, %76 : vector<8x256xf32>
    %cst_46 = arith.constant dense<0.000000e+00> : vector<8xf32>
    %78 = vector.multi_reduction <add>, %77, %cst_46 [1] : vector<8x256xf32> to vector<8xf32>
    %79 = vector.shape_cast %78 : vector<8xf32> to vector<8x1xf32>
    %cst_47 = arith.constant 2.560000e+02 : f32
    %80 = vector.broadcast %cst_47 : f32 to vector<8x1xf32>
    %81 = arith.divf %79, %80 : vector<8x1xf32>
    %82 = vector.broadcast %81 : vector<8x1xf32> to vector<8x256xf32>
    %83 = arith.subf %77, %82 : vector<8x256xf32>
    %84 = arith.mulf %83, %83 : vector<8x256xf32>
    %cst_48 = arith.constant dense<0.000000e+00> : vector<8xf32>
    %85 = vector.multi_reduction <add>, %84, %cst_48 [1] : vector<8x256xf32> to vector<8xf32>
    %86 = vector.shape_cast %85 : vector<8xf32> to vector<8x1xf32>
    %cst_49 = arith.constant 2.560000e+02 : f32
    %87 = vector.broadcast %cst_49 : f32 to vector<8x1xf32>
    %88 = arith.divf %86, %87 : vector<8x1xf32>
    %cst_50 = arith.constant 9.99999974E-6 : f32
    %89 = vector.broadcast %cst_50 : f32 to vector<8x1xf32>
    %90 = arith.addf %88, %89 : vector<8x1xf32>
    %91 = math.rsqrt %90 : vector<8x1xf32>
    %92 = vector.broadcast %91 : vector<8x1xf32> to vector<8x256xf32>
    %93 = arith.mulf %83, %92 : vector<8x256xf32>
    %94 = vector.broadcast %25 : vector<1x256xf32> to vector<8x256xf32>
    %95 = arith.mulf %93, %94 : vector<8x256xf32>
    %96 = vector.broadcast %26 : vector<1x256xf32> to vector<8x256xf32>
    %97 = arith.addf %95, %96 : vector<8x256xf32>
    %cst_51 = arith.constant 1.000000e-01 : f32
    %98 = vector.broadcast %cst_51 : f32 to vector<8x256xf32>
    %99 = arith.mulf %98, %97 : vector<8x256xf32>
    %100 = arith.addf %69, %99 : vector<8x256xf32>
    %101 = arith.truncf %100 : vector<8x256xf32> to vector<8x256xbf16>
    %c0_52 = arith.constant 0 : index
    %c0_53 = arith.constant 0 : index
    %102 = vector.load %arg7[%c0_52, %c0_53] : memref<256x128xbf16, #tpu.memory_space<vmem>>, vector<256x128xbf16>
    %cst_54 = arith.constant dense<0.000000e+00> : vector<8x128xf32>
    %103 = tpu.matmul %101, %102, %cst_54 {dimension_numbers = #tpu.dot_dimension_numbers<[1], [0], [0], [1], [0, 0, 1, 1], [], []>} : vector<8x256xbf16>, vector<256x128xbf16>, vector<8x128xf32> -> vector<8x128xf32>
    %104 = vector.broadcast %28 : vector<1x128xf32> to vector<8x128xf32>
    %105 = arith.addf %103, %104 : vector<8x128xf32>
    %cst_55 = arith.constant 2.000000e-01 : f32
    %106 = vector.broadcast %cst_55 : f32 to vector<8x128xf32>
    %107 = arith.mulf %106, %105 : vector<8x128xf32>
    %108 = arith.maximumf %105, %107 : vector<8x128xf32>
    %cst_56 = arith.constant dense<0.000000e+00> : vector<8xf32>
    %109 = vector.multi_reduction <add>, %108, %cst_56 [1] : vector<8x128xf32> to vector<8xf32>
    %110 = vector.shape_cast %109 : vector<8xf32> to vector<8x1xf32>
    %cst_57 = arith.constant 1.280000e+02 : f32
    %111 = vector.broadcast %cst_57 : f32 to vector<8x1xf32>
    %112 = arith.divf %110, %111 : vector<8x1xf32>
    %113 = vector.broadcast %112 : vector<8x1xf32> to vector<8x128xf32>
    %114 = arith.subf %108, %113 : vector<8x128xf32>
    %115 = arith.mulf %114, %114 : vector<8x128xf32>
    %cst_58 = arith.constant dense<0.000000e+00> : vector<8xf32>
    %116 = vector.multi_reduction <add>, %115, %cst_58 [1] : vector<8x128xf32> to vector<8xf32>
    %117 = vector.shape_cast %116 : vector<8xf32> to vector<8x1xf32>
    %cst_59 = arith.constant 1.280000e+02 : f32
    %118 = vector.broadcast %cst_59 : f32 to vector<8x1xf32>
    %119 = arith.divf %117, %118 : vector<8x1xf32>
    %cst_60 = arith.constant 9.99999974E-6 : f32
    %120 = vector.broadcast %cst_60 : f32 to vector<8x1xf32>
    %121 = arith.addf %119, %120 : vector<8x1xf32>
    %122 = math.rsqrt %121 : vector<8x1xf32>
    %123 = vector.broadcast %122 : vector<8x1xf32> to vector<8x128xf32>
    %124 = arith.mulf %114, %123 : vector<8x128xf32>
    %125 = vector.broadcast %29 : vector<1x128xf32> to vector<8x128xf32>
    %126 = arith.mulf %124, %125 : vector<8x128xf32>
    %127 = vector.broadcast %30 : vector<1x128xf32> to vector<8x128xf32>
    %128 = arith.addf %126, %127 : vector<8x128xf32>
    %129 = arith.truncf %128 : vector<8x128xf32> to vector<8x128xbf16>
    %c0_61 = arith.constant 0 : index
    %c0_62 = arith.constant 0 : index
    %130 = vector.load %arg9[%c0_61, %c0_62] : memref<128x128xbf16, #tpu.memory_space<vmem>>, vector<128x128xbf16>
    %cst_63 = arith.constant dense<0.000000e+00> : vector<8x128xf32>
    %131 = tpu.matmul %129, %130, %cst_63 {dimension_numbers = #tpu.dot_dimension_numbers<[1], [0], [0], [1], [0, 0, 1, 1], [], []>} : vector<8x128xbf16>, vector<128x128xbf16>, vector<8x128xf32> -> vector<8x128xf32>
    %132 = vector.broadcast %31 : vector<1x128xf32> to vector<8x128xf32>
    %133 = arith.addf %131, %132 : vector<8x128xf32>
    %cst_64 = arith.constant 2.000000e-01 : f32
    %134 = vector.broadcast %cst_64 : f32 to vector<8x128xf32>
    %135 = arith.mulf %134, %133 : vector<8x128xf32>
    %136 = arith.maximumf %133, %135 : vector<8x128xf32>
    %cst_65 = arith.constant dense<0.000000e+00> : vector<8xf32>
    %137 = vector.multi_reduction <add>, %136, %cst_65 [1] : vector<8x128xf32> to vector<8xf32>
    %138 = vector.shape_cast %137 : vector<8xf32> to vector<8x1xf32>
    %cst_66 = arith.constant 1.280000e+02 : f32
    %139 = vector.broadcast %cst_66 : f32 to vector<8x1xf32>
    %140 = arith.divf %138, %139 : vector<8x1xf32>
    %141 = vector.broadcast %140 : vector<8x1xf32> to vector<8x128xf32>
    %142 = arith.subf %136, %141 : vector<8x128xf32>
    %143 = arith.mulf %142, %142 : vector<8x128xf32>
    %cst_67 = arith.constant dense<0.000000e+00> : vector<8xf32>
    %144 = vector.multi_reduction <add>, %143, %cst_67 [1] : vector<8x128xf32> to vector<8xf32>
    %145 = vector.shape_cast %144 : vector<8xf32> to vector<8x1xf32>
    %cst_68 = arith.constant 1.280000e+02 : f32
    %146 = vector.broadcast %cst_68 : f32 to vector<8x1xf32>
    %147 = arith.divf %145, %146 : vector<8x1xf32>
    %cst_69 = arith.constant 9.99999974E-6 : f32
    %148 = vector.broadcast %cst_69 : f32 to vector<8x1xf32>
    %149 = arith.addf %147, %148 : vector<8x1xf32>
    %150 = math.rsqrt %149 : vector<8x1xf32>
    %151 = vector.broadcast %150 : vector<8x1xf32> to vector<8x128xf32>
    %152 = arith.mulf %142, %151 : vector<8x128xf32>
    %153 = vector.broadcast %32 : vector<1x128xf32> to vector<8x128xf32>
    %154 = arith.mulf %152, %153 : vector<8x128xf32>
    %155 = vector.broadcast %33 : vector<1x128xf32> to vector<8x128xf32>
    %156 = arith.addf %154, %155 : vector<8x128xf32>
    %cst_70 = arith.constant 1.000000e-01 : f32
    %157 = vector.broadcast %cst_70 : f32 to vector<8x128xf32>
    %158 = arith.mulf %157, %156 : vector<8x128xf32>
    %159 = arith.addf %128, %158 : vector<8x128xf32>
    %160 = arith.truncf %159 : vector<8x128xf32> to vector<8x128xbf16>
    %c0_71 = arith.constant 0 : index
    %c0_72 = arith.constant 0 : index
    %161 = vector.load %arg10[%c0_71, %c0_72] : memref<128x128xbf16, #tpu.memory_space<vmem>>, vector<128x128xbf16>
    %cst_73 = arith.constant dense<0.000000e+00> : vector<8x128xf32>
    %162 = tpu.matmul %160, %161, %cst_73 {dimension_numbers = #tpu.dot_dimension_numbers<[1], [0], [0], [1], [0, 0, 1, 1], [], []>} : vector<8x128xbf16>, vector<128x128xbf16>, vector<8x128xf32> -> vector<8x128xf32>
    %163 = vector.broadcast %34 : vector<1x128xf32> to vector<8x128xf32>
    %164 = arith.addf %162, %163 : vector<8x128xf32>
    %165 = tpu.iota {dimensions = array<i32: 1>} : vector<8x128xi32>
    %c127_i32 = arith.constant 127 : i32
    %166 = vector.broadcast %c127_i32 : i32 to vector<8x128xi32>
    %167 = arith.cmpi eq, %165, %166 : vector<8x128xi32>
    %cst_74 = arith.constant 5.000000e-01 : f32
    %168 = vector.broadcast %cst_74 : f32 to vector<8x128xf32>
    %169 = arith.mulf %168, %164 : vector<8x128xf32>
    %170 = math.tanh %169 : vector<8x128xf32>
    %cst_75 = arith.constant 1.000000e+00 : f32
    %171 = vector.broadcast %cst_75 : f32 to vector<8x128xf32>
    %172 = arith.addf %170, %171 : vector<8x128xf32>
    %cst_76 = arith.constant 5.000000e-01 : f32
    %173 = vector.broadcast %cst_76 : f32 to vector<8x128xf32>
    %174 = arith.mulf %173, %172 : vector<8x128xf32>
    %175 = arith.select %167, %174, %164 : vector<8x128xi1>, vector<8x128xf32>
    %c0_77 = arith.constant 0 : index
    %c0_78 = arith.constant 0 : index
    %176 = vector.load %arg11[%c0_77, %c0_78] : memref<8x128xf32, #tpu.memory_space<vmem>>, vector<8x128xf32>
    tpu.vector_store %arg11[%c0_77, %c0_78], %175 {strides = array<i32>} : memref<8x128xf32, #tpu.memory_space<vmem>>, vector<8x128xf32>,
    return
  }
}

</mosaic_0001>

<llo_original>
// kernel: discriminator_forward.1
$region0: #{discriminator_forward.1}
  #allocation0 [shape = 'u32[]', space=smem, size = 0x4, offset = 0x4, fixed_abs, tag = 'smem constant byte address 0x4 - core index']
  #allocation1 [shape = 'u32[144,128]{1,0:T(1,128)}', space=vmem, size = 0x12000, scoped, tag = 'internal scratch']
  %s0 = inlined_call_operand.vmem [shape: f32[8,33], index: 0, kind: input, shape index: {}]
  %s1 = inlined_call_operand.vmem [shape: bf16[32,256], index: 1, kind: input, shape index: {}]
  %s2 = inlined_call_operand.vmem [shape: bf16[256,16], index: 2, kind: input, shape index: {}]
  %s3 = inlined_call_operand.hbm [shape: bf16[32,256], index: 3, kind: input, shape index: {}]
  %s4 = inlined_call_operand.hbm [shape: bf16[16,256], index: 4, kind: input, shape index: {}]
  %s5 = inlined_call_operand.hbm [shape: f32[8,256], index: 5, kind: input, shape index: {}]
  %s6 = inlined_call_operand.hbm [shape: bf16[256,256], index: 6, kind: input, shape index: {}]
  %s7 = inlined_call_operand.vmem [shape: bf16[256,128], index: 7, kind: input, shape index: {}]
  %s8 = inlined_call_operand.hbm [shape: f32[8,128], index: 8, kind: input, shape index: {}]
  %s9 = inlined_call_operand.hbm [shape: bf16[128,128], index: 9, kind: input, shape index: {}]
  %s10 = inlined_call_operand.hbm [shape: bf16[128,128], index: 10, kind: input, shape index: {}]
  %s11 = inlined_call_operand.vmem [shape: f32[8,128], index: 11, kind: output, shape index: {}]
  %s12 = sld [smem:[#allocation0]]
  $region82: #{discriminator_forward.1} parent=0
    _
  %s14 = ssub.s32 1, %s12
  %s15 = scalar_select 0, %s14, %s12
  $region1: #{discriminator_forward.1} parent=0
    #allocation2 [shape = 'u8[16384]{0}', space=vmem, size = 0x4000, scoped, tag = 'input window, operand 3, single buffered']
    #allocation3 [shape = 's32[1]{0}', space=sflag, size = 0x4, scoped, tag = 'scoped memory for discriminator_forward.1']
    #allocation4 [shape = 'u8[8192]{0}', space=vmem, size = 0x2000, scoped, tag = 'input window, operand 4, single buffered']
    #allocation5 [shape = 's32[1]{0}', space=sflag, size = 0x4, scoped, tag = 'scoped memory for discriminator_forward.1']
    #allocation6 [shape = 'u8[8192]{0}', space=vmem, size = 0x2000, scoped, tag = 'input window, operand 5, single buffered']
    #allocation7 [shape = 'u8[131072]{0}', space=vmem, size = 0x20000, scoped, tag = 'input window, operand 6, single buffered']
    #allocation8 [shape = 's32[1]{0}', space=sflag, size = 0x4, scoped, tag = 'scoped memory for discriminator_forward.1']
    #allocation9 [shape = 'u8[4096]{0}', space=vmem, size = 0x1000, scoped, tag = 'input window, operand 8, single buffered']
    #allocation10 [shape = 'u8[32768]{0}', space=vmem, size = 0x8000, scoped, tag = 'input window, operand 9, single buffered']
    #allocation11 [shape = 's32[1]{0}', space=sflag, size = 0x4, scoped, tag = 'scoped memory for discriminator_forward.1']
    #allocation12 [shape = 'u8[32768]{0}', space=vmem, size = 0x8000, scoped, tag = 'input window, operand 10, single buffered']
    %16 = vsyncpa [#allocation3], 0
    %17 = vsyncpa [#allocation5], 0
    %18 = vsyncpa [#allocation8], 0
    %19 = vsyncpa [#allocation11], 0
    // Predicated region
    $region2: #{discriminator_forward.1} parent=1 // pred_check
      _
    $region3: #{discriminator_forward.1} parent=1 // pred_check_branch
      %21 = sbr.rel (0) target = $region5
    $region4: #{discriminator_forward.1} parent=1 // pred_region
      _
    $region5: #{discriminator_forward.1} parent=1 // pred_fallthru
      _
    // Predicated region
    $region6: #{discriminator_forward.1} parent=1 // pred_check
      _
    $region7: #{discriminator_forward.1} parent=1 // pred_check_branch
      %23 = sbr.rel (0) target = $region9
    $region8: #{discriminator_forward.1} parent=1 // pred_region
      _
    $region9: #{discriminator_forward.1} parent=1 // pred_fallthru
      _
    // Predicated region
    $region10: #{discriminator_forward.1} parent=1 // pred_check
      _
    $region11: #{discriminator_forward.1} parent=1 // pred_check_branch
      %25 = sbr.rel (0) target = $region13
    $region12: #{discriminator_forward.1} parent=1 // pred_region
      _
    $region13: #{discriminator_forward.1} parent=1 // pred_fallthru
      _
    // Predicated region
    $region14: #{discriminator_forward.1} parent=1 // pred_check
      _
    $region15: #{discriminator_forward.1} parent=1 // pred_check_branch
      %27 = sbr.rel (0) target = $region17
    $region16: #{discriminator_forward.1} parent=1 // pred_region
      %s29 = ssub.s32 512, 512
      %30 = vsyncadd [#allocation3], %s29
      %s31 = sshll.u32 [#allocation2], 4
      %s32 = int_to_ptr.vmem [resolvable:$true] %s31
      %37 = dma.hbm_to_vmem [thread:$0]  %s3, 512, %s32, [#allocation3], 128, 128, 8
    $region17: #{discriminator_forward.1} parent=1 // pred_fallthru
      _
    // Predicated region
    $region18: #{discriminator_forward.1} parent=1 // pred_check
      _
    $region19: #{discriminator_forward.1} parent=1 // pred_check_branch
      %39 = sbr.rel (0) target = $region21
    $region20: #{discriminator_forward.1} parent=1 // pred_region
      %s41 = ssub.s32 256, 256
      %42 = vsyncadd [#allocation5], %s41
      %s43 = sshll.u32 [#allocation4], 4
      %s44 = int_to_ptr.vmem [resolvable:$true] %s43
      %49 = dma.hbm_to_vmem [thread:$0]  %s4, 256, %s44, [#allocation5], 128, 128, 8
    $region21: #{discriminator_forward.1} parent=1 // pred_fallthru
      _
    // Predicated region
    $region22: #{discriminator_forward.1} parent=1 // pred_check
      _
    $region23: #{discriminator_forward.1} parent=1 // pred_check_branch
      %51 = sbr.rel (0) target = $region25
    $region24: #{discriminator_forward.1} parent=1 // pred_region
      %s53 = ssub.s32 256, 256
      %54 = vsyncadd [#allocation5], %s53
      %s56 = sshll.u32 [#allocation6], 4
      %s57 = int_to_ptr.vmem [resolvable:$true] %s56
      %59 = dma.hbm_to_vmem [thread:$0]  %s5, 256, %s57, [#allocation5]
    $region25: #{discriminator_forward.1} parent=1 // pred_fallthru
      _
    // Predicated region
    $region26: #{discriminator_forward.1} parent=1 // pred_check
      _
    $region27: #{discriminator_forward.1} parent=1 // pred_check_branch
      %61 = sbr.rel (0) target = $region29
    $region28: #{discriminator_forward.1} parent=1 // pred_region
      %s63 = ssub.s32 4096, 4096
      %64 = vsyncadd [#allocation8], %s63
      %s65 = sshll.u32 [#allocation7], 4
      %s66 = int_to_ptr.vmem [resolvable:$true] %s65
      %71 = dma.hbm_to_vmem [thread:$0]  %s6, 4096, %s66, [#allocation8], 128, 128, 8
    $region29: #{discriminator_forward.1} parent=1 // pred_fallthru
      _
    // Predicated region
    $region30: #{discriminator_forward.1} parent=1 // pred_check
      _
    $region31: #{discriminator_forward.1} parent=1 // pred_check_branch
      %73 = sbr.rel (0) target = $region33
    $region32: #{discriminator_forward.1} parent=1 // pred_region
      _
    $region33: #{discriminator_forward.1} parent=1 // pred_fallthru
      _
    // Predicated region
    $region34: #{discriminator_forward.1} parent=1 // pred_check
      _
    $region35: #{discriminator_forward.1} parent=1 // pred_check_branch
      %75 = sbr.rel (0) target = $region37
    $region36: #{discriminator_forward.1} parent=1 // pred_region
      %s77 = ssub.s32 128, 128
      %78 = vsyncadd [#allocation8], %s77
      %s80 = sshll.u32 [#allocation9], 4
      %s81 = int_to_ptr.vmem [resolvable:$true] %s80
      %83 = dma.hbm_to_vmem [thread:$0]  %s8, 128, %s81, [#allocation8]
    $region37: #{discriminator_forward.1} parent=1 // pred_fallthru
      _
    // Predicated region
    $region38: #{discriminator_forward.1} parent=1 // pred_check
      _
    $region39: #{discriminator_forward.1} parent=1 // pred_check_branch
      %85 = sbr.rel (0) target = $region41
    $region40: #{discriminator_forward.1} parent=1 // pred_region
      %s87 = ssub.s32 1024, 1024
      %88 = vsyncadd [#allocation11], %s87
      %s89 = sshll.u32 [#allocation10], 4
      %s90 = int_to_ptr.vmem [resolvable:$true] %s89
      %95 = dma.hbm_to_vmem [thread:$0]  %s9, 1024, %s90, [#allocation11], 64, 64, 4
    $region41: #{discriminator_forward.1} parent=1 // pred_fallthru
      _
    // Predicated region
    $region42: #{discriminator_forward.1} parent=1 // pred_check
      _
    $region43: #{discriminator_forward.1} parent=1 // pred_check_branch
      %97 = sbr.rel (0) target = $region45
    $region44: #{discriminator_forward.1} parent=1 // pred_region
      %s99 = ssub.s32 1024, 1024
      %100 = vsyncadd [#allocation11], %s99
      %s101 = sshll.u32 [#allocation12], 4
      %s102 = int_to_ptr.vmem [resolvable:$true] %s101
      %107 = dma.hbm_to_vmem [thread:$0]  %s10, 1024, %s102, [#allocation11], 64, 64, 4
    $region45: #{discriminator_forward.1} parent=1 // pred_fallthru
      _
    // Predicated region
    $region46: #{discriminator_forward.1} parent=1 // pred_check
      _
    $region47: #{discriminator_forward.1} parent=1 // pred_check_branch
      %109 = sbr.rel (0) target = $region49
    $region48: #{discriminator_forward.1} parent=1 // pred_region
      %110 = dma.done [#allocation3], 512
    $region49: #{discriminator_forward.1} parent=1 // pred_fallthru
      _
    // Predicated region
    $region50: #{discriminator_forward.1} parent=1 // pred_check
      _
    $region51: #{discriminator_forward.1} parent=1 // pred_check_branch
      %112 = sbr.rel (0) target = $region53
    $region52: #{discriminator_forward.1} parent=1 // pred_region
      %113 = dma.done [#allocation5], 256
    $region53: #{discriminator_forward.1} parent=1 // pred_fallthru
      _
    // Predicated region
    $region54: #{discriminator_forward.1} parent=1 // pred_check
      _
    $region55: #{discriminator_forward.1} parent=1 // pred_check_branch
      %115 = sbr.rel (0) target = $region57
    $region56: #{discriminator_forward.1} parent=1 // pred_region
      %116 = dma.done [#allocation5], 256
    $region57: #{discriminator_forward.1} parent=1 // pred_fallthru
      _
    // Predicated region
    $region58: #{discriminator_forward.1} parent=1 // pred_check
      _
    $region59: #{discriminator_forward.1} parent=1 // pred_check_branch
      %118 = sbr.rel (0) target = $region61
    $region60: #{discriminator_forward.1} parent=1 // pred_region
      %119 = dma.done [#allocation8], 4096
    $region61: #{discriminator_forward.1} parent=1 // pred_fallthru
      _
    // Predicated region
    $region62: #{discriminator_forward.1} parent=1 // pred_check
      _
    $region63: #{discriminator_forward.1} parent=1 // pred_check_branch
      %121 = sbr.rel (0) target = $region65
    $region64: #{discriminator_forward.1} parent=1 // pred_region
      %122 = dma.done [#allocation8], 128
    $region65: #{discriminator_forward.1} parent=1 // pred_fallthru
      _
    // Predicated region
    $region66: #{discriminator_forward.1} parent=1 // pred_check
      _
    $region67: #{discriminator_forward.1} parent=1 // pred_check_branch
      %124 = sbr.rel (0) target = $region69
    $region68: #{discriminator_forward.1} parent=1 // pred_region
      %125 = dma.done [#allocation11], 1024
    $region69: #{discriminator_forward.1} parent=1 // pred_fallthru
      _
    // Predicated region
    $region70: #{discriminator_forward.1} parent=1 // pred_check
      _
    $region71: #{discriminator_forward.1} parent=1 // pred_check_branch
      %127 = sbr.rel (0) target = $region73
    $region72: #{discriminator_forward.1} parent=1 // pred_region
      %128 = dma.done [#allocation11], 1024
    $region73: #{discriminator_forward.1} parent=1 // pred_fallthru
      _
    %v130 = vld [vmem:[%s0] sm:$0xff]
    %v131 = vpack.c.bf16 %v130, %v130
    %v132 = vld [vmem:[%s1] sm:$0xff]
    %v133 = vld [vmem:[%s1 + $0x8] sm:$0xff]
    %v134 = vld [vmem:[%s1 + $0x10] sm:$0xff]
    %v135 = vld [vmem:[%s1 + $0x18] sm:$0xff]
    %v140 = vunpack.c.l.b16 %v132
    %v141 = vunpack.c.h.b16 %v132
    %v142 = vunpack.c.l.b16 %v133
    %v143 = vunpack.c.h.b16 %v133
    %v144 = vunpack.c.l.b16 %v134
    %v145 = vunpack.c.h.b16 %v134
    %v146 = vunpack.c.l.b16 %v135
    %v147 = vunpack.c.h.b16 %v135
    %v148 = vpack.c.b16 %v142, %v140
    %v149 = vpack.c.b16 %v143, %v141
    %v150 = vpack.c.b16 %v146, %v144
    %v151 = vpack.c.b16 %v147, %v145
    %vm156 = vcmask 261120
    %v158 = vsel %vm156, %v131, 0
    %160 = vmatprep.subr.bf16.mxu0 %v149
    %161 = vmatpush1.bf16.msra.mxu0 %v148
    %162 = vmatprep.subr.bf16.mxu0 %v151
    %163 = vmatpush1.bf16.msra.mxu0 %v150
    %164 = vmatprep.subr.bf16.mxu0 0
    %165 = vmatpush1.bf16.msra.mxu0 0
    %166 = vmatprep.subr.bf16.mxu0 0
    %167 = vmatpush1.bf16.msra.mxu0 0
    %168 = vmatprep.subr.bf16.mxu0 0
    %169 = vmatpush1.bf16.msra.mxu0 0
    %170 = vmatprep.subr.bf16.mxu0 0
    %171 = vmatpush1.bf16.msra.mxu0 0
    %172 = vmatprep.subr.bf16.mxu0 0
    %173 = vmatpush1.bf16.msra.mxu0 0
    %174 = vmatprep.subr.bf16.mxu0 0
    %175 = vmatpush1.bf16.msra.mxu0 0
    %176 = vmatprep.subr.bf16.mxu0 0
    %177 = vmatpush1.bf16.msra.mxu0 0
    %178 = vmatprep.subr.bf16.mxu0 0
    %179 = vmatpush1.bf16.msra.mxu0 0
    %180 = vmatprep.subr.bf16.mxu0 0
    %181 = vmatpush1.bf16.msra.mxu0 0
    %182 = vmatprep.subr.bf16.mxu0 0
    %183 = vmatpush1.bf16.msra.mxu0 0
    %184 = vmatprep.subr.bf16.mxu0 0
    %185 = vmatpush1.bf16.msra.mxu0 0
    %186 = vmatprep.subr.bf16.mxu0 0
    %187 = vmatpush1.bf16.msra.mxu0 0
    %188 = vmatprep.subr.bf16.mxu0 0
    %189 = vmatpush1.bf16.msra.mxu0 0
    %190 = vmatprep.subr.bf16.mxu0 0
    %191 = vmatpush1.bf16.msra.mxu0 0
    %192 = vmatprep.mubr.bf16.mxu0 0
    %193 = vmatmul.mubr.bf16.gmra.mrb[0].mxu0 %v158
    %v194 = vpop.f32.mrb[0].mxu0
    %v195 = vadd.f32 0.0, %v194
    %v196 = vpop.f32.mrb[0].mxu0
    %v197 = vadd.f32 0.0, %v196
    %v198 = vpop.f32.mrb[0].mxu0
    %v199 = vpop.f32.mrb[0].mxu0
    %200 = vdwg.mxu0
    %v203 = vcombine.low %v195, %v197
    %v204 = vcombine.high %v195, %v197
    %v206 = vunpack.c.l.s4 1966171168
    %v207 = vunpack.c.0.s8 %v206
    %v208 = vlaneseq
    %v209 = vshrl.u32 %v208, 7
    %v210 = vsub.s32 %v207, %v209
    %v211 = vrot.slane %v203, %v210
    %v213 = vunpack.c.l.s4 1966171168
    %v214 = vunpack.c.0.s8 %v213
    %v215 = vlaneseq
    %v216 = vshrl.u32 %v215, 7
    %v217 = vsub.s32 %v214, %v216
    %v218 = vrot.slane %v204, %v217
    %v219 = vcombine.high %v211, %v211
    %v220 = vcombine.high %v218, %v218
    %v222 = vunpack.c.l.s4 1966171168
    %v223 = vunpack.c.0.s8 %v222
    %v224 = vlaneseq
    %v225 = vshrl.u32 %v224, 7
    %v226 = vsub.s32 %v223, %v225
    %v227 = vrot.slane %v211, %v226
    %v229 = vunpack.c.l.s4 1966171168
    %v230 = vunpack.c.0.s8 %v229
    %v231 = vlaneseq
    %v232 = vshrl.u32 %v231, 7
    %v233 = vsub.s32 %v230, %v232
    %v234 = vrot.slane %v218, %v233
    %v236 = vunpack.c.l.s4 1966171168
    %v237 = vunpack.c.0.s8 %v236
    %v238 = vlaneseq
    %v239 = vshrl.u32 %v238, 7
    %v240 = vsub.s32 %v237, %v239
    %v241 = vrot.slane %v219, %v240
    %v243 = vunpack.c.l.s4 1966171168
    %v244 = vunpack.c.0.s8 %v243
    %v245 = vlaneseq
    %v246 = vshrl.u32 %v245, 7
    %v247 = vsub.s32 %v244, %v246
    %v248 = vrot.slane %v220, %v247
    %v249 = vcombine.high %v227, %v227
    %v250 = vcombine.high %v234, %v234
    %v251 = vcombine.high %v241, %v241
    %v252 = vcombine.high %v248, %v248
    %v253 = vlaneseq
    %v254 = vshrl.u32 %v253, 7
    %v255 = vsub.s32 0, %v254
    %v256 = vrot.slane %v227, %v255
    %v257 = vlaneseq
    %v258 = vshrl.u32 %v257, 7
    %v259 = vsub.s32 1, %v258
    %v260 = vrot.slane %v227, %v259
    %v261 = vlaneseq
    %v262 = vshrl.u32 %v261, 7
    %v263 = vsub.s32 0, %v262
    %v264 = vrot.slane %v241, %v263
    %v265 = vlaneseq
    %v266 = vshrl.u32 %v265, 7
    %v267 = vsub.s32 1, %v266
    %v268 = vrot.slane %v241, %v267
    %v269 = vlaneseq
    %v270 = vshrl.u32 %v269, 7
    %v271 = vsub.s32 0, %v270
    %v272 = vrot.slane %v249, %v271
    %v273 = vlaneseq
    %v274 = vshrl.u32 %v273, 7
    %v275 = vsub.s32 1, %v274
    %v276 = vrot.slane %v249, %v275
    %v277 = vlaneseq
    %v278 = vshrl.u32 %v277, 7
    %v279 = vsub.s32 0, %v278
    %v280 = vrot.slane %v251, %v279
    %v281 = vlaneseq
    %v282 = vshrl.u32 %v281, 7
    %v283 = vsub.s32 1, %v282
    %v284 = vrot.slane %v251, %v283
    %v285 = vlaneseq
    %v286 = vshrl.u32 %v285, 7
    %v287 = vsub.s32 0, %v286
    %v288 = vrot.slane %v234, %v287
    %v289 = vlaneseq
    %v290 = vshrl.u32 %v289, 7
    %v291 = vsub.s32 1, %v290
    %v292 = vrot.slane %v234, %v291
    %v293 = vlaneseq
    %v294 = vshrl.u32 %v293, 7
    %v295 = vsub.s32 0, %v294
    %v296 = vrot.slane %v248, %v295
    %v297 = vlaneseq
    %v298 = vshrl.u32 %v297, 7
    %v299 = vsub.s32 1, %v298
    %v300 = vrot.slane %v248, %v299
    %v301 = vlaneseq
    %v302 = vshrl.u32 %v301, 7
    %v303 = vsub.s32 0, %v302
    %v304 = vrot.slane %v250, %v303
    %v305 = vlaneseq
    %v306 = vshrl.u32 %v305, 7
    %v307 = vsub.s32 1, %v306
    %v308 = vrot.slane %v250, %v307
    %v309 = vlaneseq
    %v310 = vshrl.u32 %v309, 7
    %v311 = vsub.s32 0, %v310
    %v312 = vrot.slane %v252, %v311
    %v313 = vlaneseq
    %v314 = vshrl.u32 %v313, 7
    %v315 = vsub.s32 1, %v314
    %v316 = vrot.slane %v252, %v315
    %v333 = vsub.f32 %v256, %v195
    %v334 = vsub.f32 %v260, %v197
    %v335 = vsub.f32 %v264, %v195
    %v336 = vsub.f32 %v268, %v197
    %v337 = vsub.f32 %v272, %v195
    %v338 = vsub.f32 %v276, %v197
    %v339 = vsub.f32 %v280, %v195
    %v340 = vsub.f32 %v284, %v197
    %v341 = vsub.f32 %v288, %v195
    %v342 = vsub.f32 %v292, %v197
    %v343 = vsub.f32 %v296, %v195
    %v344 = vsub.f32 %v300, %v197
    %v345 = vsub.f32 %v304, %v195
    %v346 = vsub.f32 %v308, %v197
    %v347 = vsub.f32 %v312, %v195
    %v348 = vsub.f32 %v316, %v197
    %v349 = vand.u32 2147483647, %v333
    %v350 = vand.u32 2147483647, %v334
    %v351 = vand.u32 2147483647, %v335
    %v352 = vand.u32 2147483647, %v336
    %v353 = vand.u32 2147483647, %v337
    %v354 = vand.u32 2147483647, %v338
    %v355 = vand.u32 2147483647, %v339
    %v356 = vand.u32 2147483647, %v340
    %v357 = vand.u32 2147483647, %v341
    %v358 = vand.u32 2147483647, %v342
    %v359 = vand.u32 2147483647, %v343
    %v360 = vand.u32 2147483647, %v344
    %v361 = vand.u32 2147483647, %v345
    %v362 = vand.u32 2147483647, %v346
    %v363 = vand.u32 2147483647, %v347
    %v364 = vand.u32 2147483647, %v348
    %v365 = vpack.c.bf16 %v351, %v349
    %v366 = vpack.c.bf16 %v352, %v350
    %v367 = vpack.c.bf16 %v355, %v353
    %v368 = vpack.c.bf16 %v356, %v354
    %v369 = vpack.c.bf16 %v359, %v357
    %v370 = vpack.c.bf16 %v360, %v358
    %v371 = vpack.c.bf16 %v363, %v361
    %v372 = vpack.c.bf16 %v364, %v362
    %v373 = vld [vmem:[%s2] sm:$0xf]
    %v374 = vld [vmem:[%s2 + $0x4] sm:$0xf]
    %v375 = vld [vmem:[%s2 + $0x8] sm:$0xf]
    %v376 = vld [vmem:[%s2 + $0xc] sm:$0xf]
    %v377 = vld [vmem:[%s2 + $0x10] sm:$0xf]
    %v378 = vld [vmem:[%s2 + $0x14] sm:$0xf]
    %v379 = vld [vmem:[%s2 + $0x18] sm:$0xf]
    %v380 = vld [vmem:[%s2 + $0x1c] sm:$0xf]
    %v381 = vld [vmem:[%s2 + $0x20] sm:$0xf]
    %v382 = vld [vmem:[%s2 + $0x24] sm:$0xf]
    %v383 = vld [vmem:[%s2 + $0x28] sm:$0xf]
    %v384 = vld [vmem:[%s2 + $0x2c] sm:$0xf]
    %v385 = vld [vmem:[%s2 + $0x30] sm:$0xf]
    %v386 = vld [vmem:[%s2 + $0x34] sm:$0xf]
    %v387 = vld [vmem:[%s2 + $0x38] sm:$0xf]
    %v388 = vld [vmem:[%s2 + $0x3c] sm:$0xf]
    %v389 = vld [vmem:[%s2 + $0x40] sm:$0xf]
    %v390 = vld [vmem:[%s2 + $0x44] sm:$0xf]
    %v391 = vld [vmem:[%s2 + $0x48] sm:$0xf]
    %v392 = vld [vmem:[%s2 + $0x4c] sm:$0xf]
    %v393 = vld [vmem:[%s2 + $0x50] sm:$0xf]
    %v394 = vld [vmem:[%s2 + $0x54] sm:$0xf]
    %v395 = vld [vmem:[%s2 + $0x58] sm:$0xf]
    %v396 = vld [vmem:[%s2 + $0x5c] sm:$0xf]
    %v397 = vld [vmem:[%s2 + $0x60] sm:$0xf]
    %v398 = vld [vmem:[%s2 + $0x64] sm:$0xf]
    %v399 = vld [vmem:[%s2 + $0x68] sm:$0xf]
    %v400 = vld [vmem:[%s2 + $0x6c] sm:$0xf]
    %v401 = vld [vmem:[%s2 + $0x70] sm:$0xf]
    %v402 = vld [vmem:[%s2 + $0x74] sm:$0xf]
    %v403 = vld [vmem:[%s2 + $0x78] sm:$0xf]
    %v404 = vld [vmem:[%s2 + $0x7c] sm:$0xf]
    %v437 = vunpack.c.l.b16 %v373
    %v438 = vunpack.c.l.b16 %v374
    %v439 = vunpack.c.l.b16 %v375
    %v440 = vunpack.c.l.b16 %v376
    %v441 = vunpack.c.l.b16 %v377
    %v442 = vunpack.c.l.b16 %v378
    %v443 = vunpack.c.l.b16 %v379
    %v444 = vunpack.c.l.b16 %v380
    %v445 = vunpack.c.l.b16 %v381
    %v446 = vunpack.c.l.b16 %v382
    %v447 = vunpack.c.l.b16 %v383
    %v448 = vunpack.c.l.b16 %v384
    %v449 = vunpack.c.l.b16 %v385
    %v450 = vunpack.c.l.b16 %v386
    %v451 = vunpack.c.l.b16 %v387
    %v452 = vunpack.c.l.b16 %v388
    %v453 = vunpack.c.l.b16 %v389
    %v454 = vunpack.c.l.b16 %v390
    %v455 = vunpack.c.l.b16 %v391
    %v456 = vunpack.c.l.b16 %v392
    %v457 = vunpack.c.l.b16 %v393
    %v458 = vunpack.c.l.b16 %v394
    %v459 = vunpack.c.l.b16 %v395
    %v460 = vunpack.c.l.b16 %v396
    %v461 = vunpack.c.l.b16 %v397
    %v462 = vunpack.c.l.b16 %v398
    %v463 = vunpack.c.l.b16 %v399
    %v464 = vunpack.c.l.b16 %v400
    %v465 = vunpack.c.l.b16 %v401
    %v466 = vunpack.c.l.b16 %v402
    %v467 = vunpack.c.l.b16 %v403
    %v468 = vunpack.c.l.b16 %v404
    %v469 = vpack.c.b16 %v438, %v437
    %v470 = vpack.c.b16 %v440, %v439
    %v471 = vpack.c.b16 %v442, %v441
    %v472 = vpack.c.b16 %v444, %v443
    %v473 = vpack.c.b16 %v446, %v445
    %v474 = vpack.c.b16 %v448, %v447
    %v475 = vpack.c.b16 %v450, %v449
    %v476 = vpack.c.b16 %v452, %v451
    %v477 = vpack.c.b16 %v454, %v453
    %v478 = vpack.c.b16 %v456, %v455
    %v479 = vpack.c.b16 %v458, %v457
    %v480 = vpack.c.b16 %v460, %v459
    %v481 = vpack.c.b16 %v462, %v461
    %v482 = vpack.c.b16 %v464, %v463
    %v483 = vpack.c.b16 %v466, %v465
    %v484 = vpack.c.b16 %v468, %v467
    %501 = vmatprep.subr.bf16.mxu0 0
    %502 = vmatpush1.bf16.msra.mxu0 %v469
    %503 = vmatprep.subr.bf16.mxu0 0
    %504 = vmatpush1.bf16.msra.mxu0 %v470
    %505 = vmatprep.subr.bf16.mxu0 0
    %506 = vmatpush1.bf16.msra.mxu0 %v471
    %507 = vmatprep.subr.bf16.mxu0 0
    %508 = vmatpush1.bf16.msra.mxu0 %v472
    %509 = vmatprep.subr.bf16.mxu0 0
    %510 = vmatpush1.bf16.msra.mxu0 %v473
    %511 = vmatprep.subr.bf16.mxu0 0
    %512 = vmatpush1.bf16.msra.mxu0 %v474
    %513 = vmatprep.subr.bf16.mxu0 0
    %514 = vmatpush1.bf16.msra.mxu0 %v475
    %515 = vmatprep.subr.bf16.mxu0 0
    %516 = vmatpush1.bf16.msra.mxu0 %v476
    %517 = vmatprep.subr.bf16.mxu0 0
    %518 = vmatpush1.bf16.msra.mxu0 %v477
    %519 = vmatprep.subr.bf16.mxu0 0
    %520 = vmatpush1.bf16.msra.mxu0 %v478
    %521 = vmatprep.subr.bf16.mxu0 0
    %522 = vmatpush1.bf16.msra.mxu0 %v479
    %523 = vmatprep.subr.bf16.mxu0 0
    %524 = vmatpush1.bf16.msra.mxu0 %v480
    %525 = vmatprep.subr.bf16.mxu0 0
    %526 = vmatpush1.bf16.msra.mxu0 %v481
    %527 = vmatprep.subr.bf16.mxu0 0
    %528 = vmatpush1.bf16.msra.mxu0 %v482
    %529 = vmatprep.subr.bf16.mxu0 0
    %530 = vmatpush1.bf16.msra.mxu0 %v483
    %531 = vmatprep.subr.bf16.mxu0 0
    %532 = vmatpush1.bf16.msra.mxu0 %v484
    %533 = vmatprep.mubr.bf16.mxu0 %v366
    %534 = vmatmul.mubr.bf16.gmra.mrb[0].mxu0 %v365
    %v535 = vpop.f32.mrb[0].mxu0
    %v536 = vadd.f32 0.0, %v535
    %v537 = vpop.f32.mrb[0].mxu0
    %v538 = vpop.f32.mrb[0].mxu0
    %v539 = vadd.f32 0.0, %v538
    %v540 = vpop.f32.mrb[0].mxu0
    %541 = vmatprep.mubr.bf16.mxu0 %v368
    %542 = vmatmul.mubr.bf16.gmra.mrb[0].mxu0 %v367
    %v543 = vpop.f32.mrb[0].mxu0
    %v544 = vadd.f32 0.0, %v543
    %v545 = vpop.f32.mrb[0].mxu0
    %v546 = vpop.f32.mrb[0].mxu0
    %v547 = vadd.f32 0.0, %v546
    %v548 = vpop.f32.mrb[0].mxu0
    %549 = vmatprep.mubr.bf16.mxu0 %v370
    %550 = vmatmul.mubr.bf16.gmra.mrb[0].mxu0 %v369
    %v551 = vpop.f32.mrb[0].mxu0
    %v552 = vadd.f32 0.0, %v551
    %v553 = vpop.f32.mrb[0].mxu0
    %v554 = vpop.f32.mrb[0].mxu0
    %v555 = vadd.f32 0.0, %v554
    %v556 = vpop.f32.mrb[0].mxu0
    %557 = vmatprep.mubr.bf16.mxu0 %v372
    %558 = vmatmul.mubr.bf16.gmra.mrb[0].mxu0 %v371
    %v559 = vpop.f32.mrb[0].mxu0
    %v560 = vadd.f32 0.0, %v559
    %v561 = vpop.f32.mrb[0].mxu0
    %v562 = vpop.f32.mrb[0].mxu0
    %v563 = vadd.f32 0.0, %v562
    %v564 = vpop.f32.mrb[0].mxu0
    %565 = vdwg.mxu0
    %v566 = vsub.f32 0.0, %v536
    %v567 = vsub.f32 0.0, %v539
    %v568 = vsub.f32 0.0, %v544
    %v569 = vsub.f32 0.0, %v547
    %v570 = vsub.f32 0.0, %v552
    %v571 = vsub.f32 0.0, %v555
    %v572 = vsub.f32 0.0, %v560
    %v573 = vsub.f32 0.0, %v563
    %v574 = vmul.f32 %v566, 1.442695
    %v575 = vpow.pop %v574
    %v576 = vmul.f32 %v567, 1.442695
    %v577 = vpow.pop %v576
    %v578 = vmul.f32 %v568, 1.442695
    %v579 = vpow.pop %v578
    %v580 = vmul.f32 %v569, 1.442695
    %v581 = vpow.pop %v580
    %v582 = vmul.f32 %v570, 1.442695
    %v583 = vpow.pop %v582
    %v584 = vmul.f32 %v571, 1.442695
    %v585 = vpow.pop %v584
    %v586 = vmul.f32 %v572, 1.442695
    %v587 = vpow.pop %v586
    %v588 = vmul.f32 %v573, 1.442695
    %v589 = vpow.pop %v588
    %vm590 = vcmask 130048
    %v591 = vsel %vm590, %v575, 0.0
    %v592 = vsel %vm590, %v577, 0.0
    %v593 = vadd.f32 %v591, %v592
    %v594 = vsel %vm590, %v579, 0.0
    %v595 = vadd.f32 %v593, %v594
    %v596 = vsel %vm590, %v581, 0.0
    %v597 = vadd.f32 %v595, %v596
    %v598 = vsel %vm590, %v583, 0.0
    %v599 = vadd.f32 %v597, %v598
    %v600 = vsel %vm590, %v585, 0.0
    %v601 = vadd.f32 %v599, %v600
    %v602 = vsel %vm590, %v587, 0.0
    %v603 = vadd.f32 %v601, %v602
    %v604 = vsel %vm590, %v589, 0.0
    %v605 = vadd.f32 %v603, %v604
    %v606 = vld [vmem:[#allocation6] ss:$8 sm:$0x3]
    %s607 = scalar_lea.vmem [#allocation6], 1
    %v608 = vld [vmem:[%s607] ss:$8 sm:$0x3]
    %s609 = scalar_lea.vmem [#allocation6], 2
    %v610 = vld [vmem:[%s609] ss:$8 sm:$0x3]
    %s611 = scalar_lea.vmem [#allocation6], 3
    %v612 = vld [vmem:[%s611] ss:$8 sm:$0x3]
    %s613 = scalar_lea.vmem [#allocation6], 4
    %v614 = vld [vmem:[%s613] ss:$8 sm:$0x3]
    %s615 = scalar_lea.vmem [#allocation6], 5
    %v616 = vld [vmem:[%s615] ss:$8 sm:$0x3]
    %s617 = scalar_lea.vmem [#allocation6], 6
    %v618 = vld [vmem:[%s617] ss:$8 sm:$0x3]
    %v619 = vld [vmem:[#allocation9] sm:$0x1]
    %v620 = vld [vmem:[#allocation9 + $0x1] sm:$0x1]
    %v621 = vld [vmem:[#allocation9 + $0x2] sm:$0x1]
    %v622 = vld [vmem:[#allocation9 + $0x3] sm:$0x1]
    %v623 = vld [vmem:[#allocation9 + $0x4] sm:$0x1]
    %v624 = vld [vmem:[#allocation9 + $0x5] sm:$0x1]
    %v625 = vld [vmem:[#allocation9 + $0x6] sm:$0x1]
    %v626 = vld [vmem:[#allocation2] sm:$0xff]
    %v627 = vld [vmem:[#allocation2 + $0x8] sm:$0xff]
    %v628 = vld [vmem:[#allocation2 + $0x10] sm:$0xff]
    %v629 = vld [vmem:[#allocation2 + $0x18] sm:$0xff]
    %v630 = vpack.c.bf16 %v605, %v605
    %v631 = vld [vmem:[#allocation4] sm:$0xff]
    %v632 = vld [vmem:[#allocation4 + $0x8] sm:$0xff]
    %v635 = vunpack.c.l.b16 %v631
    %v636 = vunpack.c.h.b16 %v631
    %v637 = vunpack.c.l.b16 %v632
    %v638 = vunpack.c.h.b16 %v632
    %v639 = vpack.c.b16 %v637, %v635
    %v640 = vpack.c.b16 %v638, %v636
    %v644 = vsel %vm590, %v630, 0
    %646 = vmatprep.subr.bf16.mxu0 %v640
    %647 = vmatpush1.bf16.msra.mxu0 %v639
    %648 = vmatprep.subr.bf16.mxu0 0
    %649 = vmatpush1.bf16.msra.mxu0 0
    %650 = vmatprep.subr.bf16.mxu0 0
    %651 = vmatpush1.bf16.msra.mxu0 0
    %652 = vmatprep.subr.bf16.mxu0 0
    %653 = vmatpush1.bf16.msra.mxu0 0
    %654 = vmatprep.subr.bf16.mxu0 0
    %655 = vmatpush1.bf16.msra.mxu0 0
    %656 = vmatprep.subr.bf16.mxu0 0
    %657 = vmatpush1.bf16.msra.mxu0 0
    %658 = vmatprep.subr.bf16.mxu0 0
    %659 = vmatpush1.bf16.msra.mxu0 0
    %660 = vmatprep.subr.bf16.mxu0 0
    %661 = vmatpush1.bf16.msra.mxu0 0
    %662 = vmatprep.subr.bf16.mxu0 0
    %663 = vmatpush1.bf16.msra.mxu0 0
    %664 = vmatprep.subr.bf16.mxu0 0
    %665 = vmatpush1.bf16.msra.mxu0 0
    %666 = vmatprep.subr.bf16.mxu0 0
    %667 = vmatpush1.bf16.msra.mxu0 0
    %668 = vmatprep.subr.bf16.mxu0 0
    %669 = vmatpush1.bf16.msra.mxu0 0
    %670 = vmatprep.subr.bf16.mxu0 0
    %671 = vmatpush1.bf16.msra.mxu0 0
    %672 = vmatprep.subr.bf16.mxu0 0
    %673 = vmatpush1.bf16.msra.mxu0 0
    %674 = vmatprep.subr.bf16.mxu0 0
    %675 = vmatpush1.bf16.msra.mxu0 0
    %676 = vmatprep.subr.bf16.mxu0 0
    %677 = vmatpush1.bf16.msra.mxu0 0
    %678 = vmatprep.mubr.bf16.mxu0 0
    %679 = vmatmul.mubr.bf16.gmra.mrb[0].mxu0 %v644
    %v680 = vpop.f32.mrb[0].mxu0
    %v681 = vadd.f32 0.0, %v680
    %v682 = vpop.f32.mrb[0].mxu0
    %v683 = vadd.f32 0.0, %v682
    %v684 = vpop.f32.mrb[0].mxu0
    %v685 = vpop.f32.mrb[0].mxu0
    %686 = vdwg.mxu0
    %v691 = vunpack.c.l.b16 %v626
    %v692 = vunpack.c.h.b16 %v626
    %v693 = vunpack.c.l.b16 %v627
    %v694 = vunpack.c.h.b16 %v627
    %v695 = vunpack.c.l.b16 %v628
    %v696 = vunpack.c.h.b16 %v628
    %v697 = vunpack.c.l.b16 %v629
    %v698 = vunpack.c.h.b16 %v629
    %v699 = vpack.c.b16 %v693, %v691
    %v700 = vpack.c.b16 %v694, %v692
    %v701 = vpack.c.b16 %v697, %v695
    %v702 = vpack.c.b16 %v698, %v696
    %707 = vmatprep.subr.bf16.mxu0 %v700
    %708 = vmatpush1.bf16.msra.mxu0 %v699
    %709 = vmatprep.subr.bf16.mxu0 %v702
    %710 = vmatpush1.bf16.msra.mxu0 %v701
    %711 = vmatprep.subr.bf16.mxu0 0
    %712 = vmatpush1.bf16.msra.mxu0 0
    %713 = vmatprep.subr.bf16.mxu0 0
    %714 = vmatpush1.bf16.msra.mxu0 0
    %715 = vmatprep.subr.bf16.mxu0 0
    %716 = vmatpush1.bf16.msra.mxu0 0
    %717 = vmatprep.subr.bf16.mxu0 0
    %718 = vmatpush1.bf16.msra.mxu0 0
    %719 = vmatprep.subr.bf16.mxu0 0
    %720 = vmatpush1.bf16.msra.mxu0 0
    %721 = vmatprep.subr.bf16.mxu0 0
    %722 = vmatpush1.bf16.msra.mxu0 0
    %723 = vmatprep.subr.bf16.mxu0 0
    %724 = vmatpush1.bf16.msra.mxu0 0
    %725 = vmatprep.subr.bf16.mxu0 0
    %726 = vmatpush1.bf16.msra.mxu0 0
    %727 = vmatprep.subr.bf16.mxu0 0
    %728 = vmatpush1.bf16.msra.mxu0 0
    %729 = vmatprep.subr.bf16.mxu0 0
    %730 = vmatpush1.bf16.msra.mxu0 0
    %731 = vmatprep.subr.bf16.mxu0 0
    %732 = vmatpush1.bf16.msra.mxu0 0
    %733 = vmatprep.subr.bf16.mxu0 0
    %734 = vmatpush1.bf16.msra.mxu0 0
    %735 = vmatprep.subr.bf16.mxu0 0
    %736 = vmatpush1.bf16.msra.mxu0 0
    %737 = vmatprep.subr.bf16.mxu0 0
    %738 = vmatpush1.bf16.msra.mxu0 0
    %739 = vmatprep.mubr.bf16.mxu0 0
    %740 = vmatmul.mubr.bf16.gmra.mrb[0].mxu0 %v158
    %v741 = vpop.f32.mrb[0].mxu0
    %v742 = vadd.f32 %v681, %v741
    %v743 = vpop.f32.mrb[0].mxu0
    %v744 = vadd.f32 %v683, %v743
    %v745 = vpop.f32.mrb[0].mxu0
    %v746 = vpop.f32.mrb[0].mxu0
    %747 = vdwg.mxu0
    %749 = vset.pattern.permute.xlu0 32
    %750 = vperm.xlu0 %749, %v130
    %v751 = vpop.permute.xlu0 %750
    %v754 = vlaneseq
    %v755 = vshrl.u32 %v754, 7
    %v756 = vsub.s32 0, %v755
    %v757 = vrot.slane %v618, %v756
    %v758 = vlaneseq
    %v759 = vshrl.u32 %v758, 7
    %v760 = vsub.s32 1, %v759
    %v761 = vrot.slane %v618, %v760
    %v764 = vmul.f32 %v751, %v757
    %v765 = vmul.f32 %v751, %v761
    %v766 = vadd.f32 %v742, %v764
    %v767 = vadd.f32 %v744, %v765
    %v769 = vlaneseq
    %v770 = vshrl.u32 %v769, 7
    %v771 = vsub.s32 0, %v770
    %v772 = vrot.slane %v606, %v771
    %v773 = vlaneseq
    %v774 = vshrl.u32 %v773, 7
    %v775 = vsub.s32 1, %v774
    %v776 = vrot.slane %v606, %v775
    %v779 = vadd.f32 %v766, %v772
    %v780 = vadd.f32 %v767, %v776
    %v781 = vmul.f32 %v779, 0.2
    %v782 = vmul.f32 %v780, 0.2
    %v783 = vmax.f32 %v779, %v781
    %v784 = vmax.f32 %v780, %v782
    %v785 = vadd.f32 %v783, %v784
    %786 = vadd.xlane.f32.xlu0 %v785
    %v787 = vpop.xlane.xlu0 %786
    %v788 = vrcp.pop 256.0
    %v789 = vmul.f32 %v787, %v788
    %v790 = vsub.f32 %v783, %v789
    %v791 = vsub.f32 %v784, %v789
    %v792 = vmul.f32 %v790, %v790
    %v793 = vmul.f32 %v791, %v791
    %v794 = vadd.f32 %v792, %v793
    %795 = vadd.xlane.f32.xlu0 %v794
    %v796 = vpop.xlane.xlu0 %795
    %v797 = vmul.f32 %v796, %v788
    %v798 = vadd.f32 %v797, 1e-05
    %v799 = vrsqrt.pop %v798
    %v800 = vmul.f32 %v790, %v799
    %v801 = vmul.f32 %v791, %v799
    %v803 = vlaneseq
    %v804 = vshrl.u32 %v803, 7
    %v805 = vsub.s32 0, %v804
    %v806 = vrot.slane %v608, %v805
    %v807 = vlaneseq
    %v808 = vshrl.u32 %v807, 7
    %v809 = vsub.s32 1, %v808
    %v810 = vrot.slane %v608, %v809
    %v813 = vmul.f32 %v800, %v806
    %v814 = vmul.f32 %v801, %v810
    %v816 = vlaneseq
    %v817 = vshrl.u32 %v816, 7
    %v818 = vsub.s32 0, %v817
    %v819 = vrot.slane %v610, %v818
    %v820 = vlaneseq
    %v821 = vshrl.u32 %v820, 7
    %v822 = vsub.s32 1, %v821
    %v823 = vrot.slane %v610, %v822
    %v826 = vadd.f32 %v813, %v819
    %v827 = vadd.f32 %v814, %v823
    %v828 = vpack.c.bf16 %v826, %v826
    %v829 = vpack.c.bf16 %v827, %v827
    %v830 = vld [vmem:[#allocation7] sm:$0xff]
    %v831 = vld [vmem:[#allocation7 + $0x8] sm:$0xff]
    %v832 = vld [vmem:[#allocation7 + $0x10] sm:$0xff]
    %v833 = vld [vmem:[#allocation7 + $0x18] sm:$0xff]
    %v834 = vld [vmem:[#allocation7 + $0x20] sm:$0xff]
    %v835 = vld [vmem:[#allocation7 + $0x28] sm:$0xff]
    %v836 = vld [vmem:[#allocation7 + $0x30] sm:$0xff]
    %v837 = vld [vmem:[#allocation7 + $0x38] sm:$0xff]
    %v838 = vld [vmem:[#allocation7 + $0x40] sm:$0xff]
    %v839 = vld [vmem:[#allocation7 + $0x48] sm:$0xff]
    %v840 = vld [vmem:[#allocation7 + $0x50] sm:$0xff]
    %v841 = vld [vmem:[#allocation7 + $0x58] sm:$0xff]
    %v842 = vld [vmem:[#allocation7 + $0x60] sm:$0xff]
    %v843 = vld [vmem:[#allocation7 + $0x68] sm:$0xff]
    %v844 = vld [vmem:[#allocation7 + $0x70] sm:$0xff]
    %v845 = vld [vmem:[#allocation7 + $0x78] sm:$0xff]
    %v846 = vld [vmem:[#allocation7 + $0x80] sm:$0xff]
    %v847 = vld [vmem:[#allocation7 + $0x88] sm:$0xff]
    %v848 = vld [vmem:[#allocation7 + $0x90] sm:$0xff]
    %v849 = vld [vmem:[#allocation7 + $0x98] sm:$0xff]
    %v850 = vld [vmem:[#allocation7 + $0xa0] sm:$0xff]
    %v851 = vld [vmem:[#allocation7 + $0xa8] sm:$0xff]
    %v852 = vld [vmem:[#allocation7 + $0xb0] sm:$0xff]
    %v853 = vld [vmem:[#allocation7 + $0xb8] sm:$0xff]
    %v854 = vld [vmem:[#allocation7 + $0xc0] sm:$0xff]
    %v855 = vld [vmem:[#allocation7 + $0xc8] sm:$0xff]
    %v856 = vld [vmem:[#allocation7 + $0xd0] sm:$0xff]
    %v857 = vld [vmem:[#allocation7 + $0xd8] sm:$0xff]
    %v858 = vld [vmem:[#allocation7 + $0xe0] sm:$0xff]
    %v859 = vld [vmem:[#allocation7 + $0xe8] sm:$0xff]
    %v860 = vld [vmem:[#allocation7 + $0xf0] sm:$0xff]
    %v861 = vld [vmem:[#allocation7 + $0xf8] sm:$0xff]
    %v863 = vlaneseq
    %v864 = vshrl.u32 %v863, 7
    %v865 = vsub.s32 0, %v864
    %v866 = vrot.slane %v612, %v865
    %v867 = vlaneseq
    %v868 = vshrl.u32 %v867, 7
    %v869 = vsub.s32 1, %v868
    %v870 = vrot.slane %v612, %v869
    %v905 = vunpack.c.l.b16 %v830
    %v906 = vunpack.c.h.b16 %v830
    %v907 = vunpack.c.l.b16 %v831
    %v908 = vunpack.c.h.b16 %v831
    %v909 = vunpack.c.l.b16 %v832
    %v910 = vunpack.c.h.b16 %v832
    %v911 = vunpack.c.l.b16 %v833
    %v912 = vunpack.c.h.b16 %v833
    %v913 = vunpack.c.l.b16 %v834
    %v914 = vunpack.c.h.b16 %v834
    %v915 = vunpack.c.l.b16 %v835
    %v916 = vunpack.c.h.b16 %v835
    %v917 = vunpack.c.l.b16 %v836
    %v918 = vunpack.c.h.b16 %v836
    %v919 = vunpack.c.l.b16 %v837
    %v920 = vunpack.c.h.b16 %v837
    %v921 = vunpack.c.l.b16 %v838
    %v922 = vunpack.c.h.b16 %v838
    %v923 = vunpack.c.l.b16 %v839
    %v924 = vunpack.c.h.b16 %v839
    %v925 = vunpack.c.l.b16 %v840
    %v926 = vunpack.c.h.b16 %v840
    %v927 = vunpack.c.l.b16 %v841
    %v928 = vunpack.c.h.b16 %v841
    %v929 = vunpack.c.l.b16 %v842
    %v930 = vunpack.c.h.b16 %v842
    %v931 = vunpack.c.l.b16 %v843
    %v932 = vunpack.c.h.b16 %v843
    %v933 = vunpack.c.l.b16 %v844
    %v934 = vunpack.c.h.b16 %v844
    %v935 = vunpack.c.l.b16 %v845
    %v936 = vunpack.c.h.b16 %v845
    %v937 = vunpack.c.l.b16 %v846
    %v938 = vunpack.c.h.b16 %v846
    %v939 = vunpack.c.l.b16 %v847
    %v940 = vunpack.c.h.b16 %v847
    %v941 = vunpack.c.l.b16 %v848
    %v942 = vunpack.c.h.b16 %v848
    %v943 = vunpack.c.l.b16 %v849
    %v944 = vunpack.c.h.b16 %v849
    %v945 = vunpack.c.l.b16 %v850
    %v946 = vunpack.c.h.b16 %v850
    %v947 = vunpack.c.l.b16 %v851
    %v948 = vunpack.c.h.b16 %v851
    %v949 = vunpack.c.l.b16 %v852
    %v950 = vunpack.c.h.b16 %v852
    %v951 = vunpack.c.l.b16 %v853
    %v952 = vunpack.c.h.b16 %v853
    %v953 = vunpack.c.l.b16 %v854
    %v954 = vunpack.c.h.b16 %v854
    %v955 = vunpack.c.l.b16 %v855
    %v956 = vunpack.c.h.b16 %v855
    %v957 = vunpack.c.l.b16 %v856
    %v958 = vunpack.c.h.b16 %v856
    %v959 = vunpack.c.l.b16 %v857
    %v960 = vunpack.c.h.b16 %v857
    %v961 = vunpack.c.l.b16 %v858
    %v962 = vunpack.c.h.b16 %v858
    %v963 = vunpack.c.l.b16 %v859
    %v964 = vunpack.c.h.b16 %v859
    %v965 = vunpack.c.l.b16 %v860
    %v966 = vunpack.c.h.b16 %v860
    %v967 = vunpack.c.l.b16 %v861
    %v968 = vunpack.c.h.b16 %v861
    %v969 = vpack.c.b16 %v907, %v905
    %v970 = vpack.c.b16 %v908, %v906
    %v971 = vpack.c.b16 %v911, %v909
    %v972 = vpack.c.b16 %v912, %v910
    %v973 = vpack.c.b16 %v915, %v913
    %v974 = vpack.c.b16 %v916, %v914
    %v975 = vpack.c.b16 %v919, %v917
    %v976 = vpack.c.b16 %v920, %v918
    %v977 = vpack.c.b16 %v923, %v921
    %v978 = vpack.c.b16 %v924, %v922
    %v979 = vpack.c.b16 %v927, %v925
    %v980 = vpack.c.b16 %v928, %v926
    %v981 = vpack.c.b16 %v931, %v929
    %v982 = vpack.c.b16 %v932, %v930
    %v983 = vpack.c.b16 %v935, %v933
    %v984 = vpack.c.b16 %v936, %v934
    %v985 = vpack.c.b16 %v939, %v937
    %v986 = vpack.c.b16 %v940, %v938
    %v987 = vpack.c.b16 %v943, %v941
    %v988 = vpack.c.b16 %v944, %v942
    %v989 = vpack.c.b16 %v947, %v945
    %v990 = vpack.c.b16 %v948, %v946
    %v991 = vpack.c.b16 %v951, %v949
    %v992 = vpack.c.b16 %v952, %v950
    %v993 = vpack.c.b16 %v955, %v953
    %v994 = vpack.c.b16 %v956, %v954
    %v995 = vpack.c.b16 %v959, %v957
    %v996 = vpack.c.b16 %v960, %v958
    %v997 = vpack.c.b16 %v963, %v961
    %v998 = vpack.c.b16 %v964, %v962
    %v999 = vpack.c.b16 %v967, %v965
    %v1000 = vpack.c.b16 %v968, %v966
    %1033 = vmatprep.subr.bf16.mxu0 %v970
    %1034 = vmatpush1.bf16.msra.mxu0 %v969
    %1035 = vmatprep.subr.bf16.mxu0 %v972
    %1036 = vmatpush1.bf16.msra.mxu0 %v971
    %1037 = vmatprep.subr.bf16.mxu0 %v974
    %1038 = vmatpush1.bf16.msra.mxu0 %v973
    %1039 = vmatprep.subr.bf16.mxu0 %v976
    %1040 = vmatpush1.bf16.msra.mxu0 %v975
    %1041 = vmatprep.subr.bf16.mxu0 %v978
    %1042 = vmatpush1.bf16.msra.mxu0 %v977
    %1043 = vmatprep.subr.bf16.mxu0 %v980
    %1044 = vmatpush1.bf16.msra.mxu0 %v979
    %1045 = vmatprep.subr.bf16.mxu0 %v982
    %1046 = vmatpush1.bf16.msra.mxu0 %v981
    %1047 = vmatprep.subr.bf16.mxu0 %v984
    %1048 = vmatpush1.bf16.msra.mxu0 %v983
    %1049 = vmatprep.subr.bf16.mxu0 %v986
    %1050 = vmatpush1.bf16.msra.mxu0 %v985
    %1051 = vmatprep.subr.bf16.mxu0 %v988
    %1052 = vmatpush1.bf16.msra.mxu0 %v987
    %1053 = vmatprep.subr.bf16.mxu0 %v990
    %1054 = vmatpush1.bf16.msra.mxu0 %v989
    %1055 = vmatprep.subr.bf16.mxu0 %v992
    %1056 = vmatpush1.bf16.msra.mxu0 %v991
    %1057 = vmatprep.subr.bf16.mxu0 %v994
    %1058 = vmatpush1.bf16.msra.mxu0 %v993
    %1059 = vmatprep.subr.bf16.mxu0 %v996
    %1060 = vmatpush1.bf16.msra.mxu0 %v995
    %1061 = vmatprep.subr.bf16.mxu0 %v998
    %1062 = vmatpush1.bf16.msra.mxu0 %v997
    %1063 = vmatprep.subr.bf16.mxu0 %v1000
    %1064 = vmatpush1.bf16.msra.mxu0 %v999
    %1065 = vmatprep.mubr.bf16.mxu0 %v829
    %1066 = vmatmul.mubr.bf16.gmra.mrb[0].mxu0 %v828
    %v1067 = vpop.f32.mrb[0].mxu0
    %v1068 = vadd.f32 %v866, %v1067
    %v1069 = vpop.f32.mrb[0].mxu0
    %v1070 = vadd.f32 %v870, %v1069
    %v1071 = vpop.f32.mrb[0].mxu0
    %v1072 = vpop.f32.mrb[0].mxu0
    %1073 = vdwg.mxu0
    %v1074 = vmul.f32 %v1068, 0.2
    %v1075 = vmul.f32 %v1070, 0.2
    %v1076 = vmax.f32 %v1068, %v1074
    %v1077 = vmax.f32 %v1070, %v1075
    %v1078 = vadd.f32 %v1076, %v1077
    %1079 = vadd.xlane.f32.xlu0 %v1078
    %v1080 = vpop.xlane.xlu0 %1079
    %v1081 = vmul.f32 %v1080, %v788
    %v1082 = vsub.f32 %v1076, %v1081
    %v1083 = vsub.f32 %v1077, %v1081
    %v1084 = vmul.f32 %v1082, %v1082
    %v1085 = vmul.f32 %v1083, %v1083
    %v1086 = vadd.f32 %v1084, %v1085
    %1087 = vadd.xlane.f32.xlu0 %v1086
    %v1088 = vpop.xlane.xlu0 %1087
    %v1089 = vmul.f32 %v1088, %v788
    %v1090 = vadd.f32 %v1089, 1e-05
    %v1091 = vrsqrt.pop %v1090
    %v1092 = vmul.f32 %v1082, %v1091
    %v1093 = vmul.f32 %v1083, %v1091
    %v1095 = vlaneseq
    %v1096 = vshrl.u32 %v1095, 7
    %v1097 = vsub.s32 0, %v1096
    %v1098 = vrot.slane %v614, %v1097
    %v1099 = vlaneseq
    %v1100 = vshrl.u32 %v1099, 7
    %v1101 = vsub.s32 1, %v1100
    %v1102 = vrot.slane %v614, %v1101
    %v1105 = vmul.f32 %v1092, %v1098
    %v1106 = vmul.f32 %v1093, %v1102
    %v1108 = vlaneseq
    %v1109 = vshrl.u32 %v1108, 7
    %v1110 = vsub.s32 0, %v1109
    %v1111 = vrot.slane %v616, %v1110
    %v1112 = vlaneseq
    %v1113 = vshrl.u32 %v1112, 7
    %v1114 = vsub.s32 1, %v1113
    %v1115 = vrot.slane %v616, %v1114
    %v1118 = vadd.f32 %v1105, %v1111
    %v1119 = vadd.f32 %v1106, %v1115
    %v1120 = vmul.f32 %v1118, 0.1
    %v1121 = vmul.f32 %v1119, 0.1
    %v1122 = vadd.f32 %v826, %v1120
    %v1123 = vadd.f32 %v827, %v1121
    %v1124 = vpack.c.bf16 %v1122, %v1122
    %v1125 = vpack.c.bf16 %v1123, %v1123
    %v1126 = vld [vmem:[%s7] sm:$0xf]
    %v1127 = vld [vmem:[%s7 + $0x4] sm:$0xf]
    %v1128 = vld [vmem:[%s7 + $0x8] sm:$0xf]
    %v1129 = vld [vmem:[%s7 + $0xc] sm:$0xf]
    %v1130 = vld [vmem:[%s7 + $0x10] sm:$0xf]
    %v1131 = vld [vmem:[%s7 + $0x14] sm:$0xf]
    %v1132 = vld [vmem:[%s7 + $0x18] sm:$0xf]
    %v1133 = vld [vmem:[%s7 + $0x1c] sm:$0xf]
    %v1134 = vld [vmem:[%s7 + $0x20] sm:$0xf]
    %v1135 = vld [vmem:[%s7 + $0x24] sm:$0xf]
    %v1136 = vld [vmem:[%s7 + $0x28] sm:$0xf]
    %v1137 = vld [vmem:[%s7 + $0x2c] sm:$0xf]
    %v1138 = vld [vmem:[%s7 + $0x30] sm:$0xf]
    %v1139 = vld [vmem:[%s7 + $0x34] sm:$0xf]
    %v1140 = vld [vmem:[%s7 + $0x38] sm:$0xf]
    %v1141 = vld [vmem:[%s7 + $0x3c] sm:$0xf]
    %v1142 = vld [vmem:[%s7 + $0x40] sm:$0xf]
    %v1143 = vld [vmem:[%s7 + $0x44] sm:$0xf]
    %v1144 = vld [vmem:[%s7 + $0x48] sm:$0xf]
    %v1145 = vld [vmem:[%s7 + $0x4c] sm:$0xf]
    %v1146 = vld [vmem:[%s7 + $0x50] sm:$0xf]
    %v1147 = vld [vmem:[%s7 + $0x54] sm:$0xf]
    %v1148 = vld [vmem:[%s7 + $0x58] sm:$0xf]
    %v1149 = vld [vmem:[%s7 + $0x5c] sm:$0xf]
    %v1150 = vld [vmem:[%s7 + $0x60] sm:$0xf]
    %v1151 = vld [vmem:[%s7 + $0x64] sm:$0xf]
    %v1152 = vld [vmem:[%s7 + $0x68] sm:$0xf]
    %v1153 = vld [vmem:[%s7 + $0x6c] sm:$0xf]
    %v1154 = vld [vmem:[%s7 + $0x70] sm:$0xf]
    %v1155 = vld [vmem:[%s7 + $0x74] sm:$0xf]
    %v1156 = vld [vmem:[%s7 + $0x78] sm:$0xf]
    %v1157 = vld [vmem:[%s7 + $0x7c] sm:$0xf]
    %v1158 = vlaneseq
    %v1159 = vshrl.u32 %v1158, 7
    %v1160 = vsub.s32 0, %v1159
    %v1161 = vrot.slane %v619, %v1160
    %v1194 = vunpack.c.l.b16 %v1126
    %v1195 = vunpack.c.l.b16 %v1127
    %v1196 = vunpack.c.l.b16 %v1128
    %v1197 = vunpack.c.l.b16 %v1129
    %v1198 = vunpack.c.l.b16 %v1130
    %v1199 = vunpack.c.l.b16 %v1131
    %v1200 = vunpack.c.l.b16 %v1132
    %v1201 = vunpack.c.l.b16 %v1133
    %v1202 = vunpack.c.l.b16 %v1134
    %v1203 = vunpack.c.l.b16 %v1135
    %v1204 = vunpack.c.l.b16 %v1136
    %v1205 = vunpack.c.l.b16 %v1137
    %v1206 = vunpack.c.l.b16 %v1138
    %v1207 = vunpack.c.l.b16 %v1139
    %v1208 = vunpack.c.l.b16 %v1140
    %v1209 = vunpack.c.l.b16 %v1141
    %v1210 = vunpack.c.l.b16 %v1142
    %v1211 = vunpack.c.l.b16 %v1143
    %v1212 = vunpack.c.l.b16 %v1144
    %v1213 = vunpack.c.l.b16 %v1145
    %v1214 = vunpack.c.l.b16 %v1146
    %v1215 = vunpack.c.l.b16 %v1147
    %v1216 = vunpack.c.l.b16 %v1148
    %v1217 = vunpack.c.l.b16 %v1149
    %v1218 = vunpack.c.l.b16 %v1150
    %v1219 = vunpack.c.l.b16 %v1151
    %v1220 = vunpack.c.l.b16 %v1152
    %v1221 = vunpack.c.l.b16 %v1153
    %v1222 = vunpack.c.l.b16 %v1154
    %v1223 = vunpack.c.l.b16 %v1155
    %v1224 = vunpack.c.l.b16 %v1156
    %v1225 = vunpack.c.l.b16 %v1157
    %v1226 = vpack.c.b16 %v1195, %v1194
    %v1227 = vpack.c.b16 %v1197, %v1196
    %v1228 = vpack.c.b16 %v1199, %v1198
    %v1229 = vpack.c.b16 %v1201, %v1200
    %v1230 = vpack.c.b16 %v1203, %v1202
    %v1231 = vpack.c.b16 %v1205, %v1204
    %v1232 = vpack.c.b16 %v1207, %v1206
    %v1233 = vpack.c.b16 %v1209, %v1208
    %v1234 = vpack.c.b16 %v1211, %v1210
    %v1235 = vpack.c.b16 %v1213, %v1212
    %v1236 = vpack.c.b16 %v1215, %v1214
    %v1237 = vpack.c.b16 %v1217, %v1216
    %v1238 = vpack.c.b16 %v1219, %v1218
    %v1239 = vpack.c.b16 %v1221, %v1220
    %v1240 = vpack.c.b16 %v1223, %v1222
    %v1241 = vpack.c.b16 %v1225, %v1224
    %1258 = vmatprep.subr.bf16.mxu0 0
    %1259 = vmatpush1.bf16.msra.mxu0 %v1226
    %1260 = vmatprep.subr.bf16.mxu0 0
    %1261 = vmatpush1.bf16.msra.mxu0 %v1227
    %1262 = vmatprep.subr.bf16.mxu0 0
    %1263 = vmatpush1.bf16.msra.mxu0 %v1228
    %1264 = vmatprep.subr.bf16.mxu0 0
    %1265 = vmatpush1.bf16.msra.mxu0 %v1229
    %1266 = vmatprep.subr.bf16.mxu0 0
    %1267 = vmatpush1.bf16.msra.mxu0 %v1230
    %1268 = vmatprep.subr.bf16.mxu0 0
    %1269 = vmatpush1.bf16.msra.mxu0 %v1231
    %1270 = vmatprep.subr.bf16.mxu0 0
    %1271 = vmatpush1.bf16.msra.mxu0 %v1232
    %1272 = vmatprep.subr.bf16.mxu0 0
    %1273 = vmatpush1.bf16.msra.mxu0 %v1233
    %1274 = vmatprep.subr.bf16.mxu0 0
    %1275 = vmatpush1.bf16.msra.mxu0 %v1234
    %1276 = vmatprep.subr.bf16.mxu0 0
    %1277 = vmatpush1.bf16.msra.mxu0 %v1235
    %1278 = vmatprep.subr.bf16.mxu0 0
    %1279 = vmatpush1.bf16.msra.mxu0 %v1236
    %1280 = vmatprep.subr.bf16.mxu0 0
    %1281 = vmatpush1.bf16.msra.mxu0 %v1237
    %1282 = vmatprep.subr.bf16.mxu0 0
    %1283 = vmatpush1.bf16.msra.mxu0 %v1238
    %1284 = vmatprep.subr.bf16.mxu0 0
    %1285 = vmatpush1.bf16.msra.mxu0 %v1239
    %1286 = vmatprep.subr.bf16.mxu0 0
    %1287 = vmatpush1.bf16.msra.mxu0 %v1240
    %1288 = vmatprep.subr.bf16.mxu0 0
    %1289 = vmatpush1.bf16.msra.mxu0 %v1241
    %1290 = vmatprep.mubr.bf16.mxu0 %v1125
    %1291 = vmatmul.mubr.bf16.gmra.mrb[0].mxu0 %v1124
    %v1292 = vpop.f32.mrb[0].mxu0
    %v1293 = vadd.f32 %v1161, %v1292
    %v1294 = vpop.f32.mrb[0].mxu0
    %v1295 = vpop.f32.mrb[0].mxu0
    %v1296 = vpop.f32.mrb[0].mxu0
    %1297 = vdwg.mxu0
    %v1298 = vmul.f32 %v1293, 0.2
    %v1299 = vmax.f32 %v1293, %v1298
    %1300 = vadd.xlane.f32.xlu0 %v1299
    %v1301 = vpop.xlane.xlu0 %1300
    %v1302 = vrcp.pop 128.0
    %v1303 = vmul.f32 %v1301, %v1302
    %v1304 = vsub.f32 %v1299, %v1303
    %v1305 = vmul.f32 %v1304, %v1304
    %1306 = vadd.xlane.f32.xlu0 %v1305
    %v1307 = vpop.xlane.xlu0 %1306
    %v1308 = vmul.f32 %v1307, %v1302
    %v1309 = vadd.f32 %v1308, 1e-05
    %v1310 = vrsqrt.pop %v1309
    %v1311 = vmul.f32 %v1304, %v1310
    %v1312 = vlaneseq
    %v1313 = vshrl.u32 %v1312, 7
    %v1314 = vsub.s32 0, %v1313
    %v1315 = vrot.slane %v620, %v1314
    %v1316 = vmul.f32 %v1311, %v1315
    %v1317 = vlaneseq
    %v1318 = vshrl.u32 %v1317, 7
    %v1319 = vsub.s32 0, %v1318
    %v1320 = vrot.slane %v621, %v1319
    %v1321 = vadd.f32 %v1316, %v1320
    %v1322 = vpack.c.bf16 %v1321, %v1321
    %v1323 = vld [vmem:[#allocation10] sm:$0xf]
    %v1324 = vld [vmem:[#allocation10 + $0x4] sm:$0xf]
    %v1325 = vld [vmem:[#allocation10 + $0x8] sm:$0xf]
    %v1326 = vld [vmem:[#allocation10 + $0xc] sm:$0xf]
    %v1327 = vld [vmem:[#allocation10 + $0x10] sm:$0xf]
    %v1328 = vld [vmem:[#allocation10 + $0x14] sm:$0xf]
    %v1329 = vld [vmem:[#allocation10 + $0x18] sm:$0xf]
    %v1330 = vld [vmem:[#allocation10 + $0x1c] sm:$0xf]
    %v1331 = vld [vmem:[#allocation10 + $0x20] sm:$0xf]
    %v1332 = vld [vmem:[#allocation10 + $0x24] sm:$0xf]
    %v1333 = vld [vmem:[#allocation10 + $0x28] sm:$0xf]
    %v1334 = vld [vmem:[#allocation10 + $0x2c] sm:$0xf]
    %v1335 = vld [vmem:[#allocation10 + $0x30] sm:$0xf]
    %v1336 = vld [vmem:[#allocation10 + $0x34] sm:$0xf]
    %v1337 = vld [vmem:[#allocation10 + $0x38] sm:$0xf]
    %v1338 = vld [vmem:[#allocation10 + $0x3c] sm:$0xf]
    %v1339 = vlaneseq
    %v1340 = vshrl.u32 %v1339, 7
    %v1341 = vsub.s32 0, %v1340
    %v1342 = vrot.slane %v622, %v1341
    %v1359 = vunpack.c.l.b16 %v1323
    %v1360 = vunpack.c.l.b16 %v1324
    %v1361 = vunpack.c.l.b16 %v1325
    %v1362 = vunpack.c.l.b16 %v1326
    %v1363 = vunpack.c.l.b16 %v1327
    %v1364 = vunpack.c.l.b16 %v1328
    %v1365 = vunpack.c.l.b16 %v1329
    %v1366 = vunpack.c.l.b16 %v1330
    %v1367 = vunpack.c.l.b16 %v1331
    %v1368 = vunpack.c.l.b16 %v1332
    %v1369 = vunpack.c.l.b16 %v1333
    %v1370 = vunpack.c.l.b16 %v1334
    %v1371 = vunpack.c.l.b16 %v1335
    %v1372 = vunpack.c.l.b16 %v1336
    %v1373 = vunpack.c.l.b16 %v1337
    %v1374 = vunpack.c.l.b16 %v1338
    %v1375 = vpack.c.b16 %v1360, %v1359
    %v1376 = vpack.c.b16 %v1362, %v1361
    %v1377 = vpack.c.b16 %v1364, %v1363
    %v1378 = vpack.c.b16 %v1366, %v1365
    %v1379 = vpack.c.b16 %v1368, %v1367
    %v1380 = vpack.c.b16 %v1370, %v1369
    %v1381 = vpack.c.b16 %v1372, %v1371
    %v1382 = vpack.c.b16 %v1374, %v1373
    %1391 = vmatprep.subr.bf16.mxu0 0
    %1392 = vmatpush1.bf16.msra.mxu0 %v1375
    %1393 = vmatprep.subr.bf16.mxu0 0
    %1394 = vmatpush1.bf16.msra.mxu0 %v1376
    %1395 = vmatprep.subr.bf16.mxu0 0
    %1396 = vmatpush1.bf16.msra.mxu0 %v1377
    %1397 = vmatprep.subr.bf16.mxu0 0
    %1398 = vmatpush1.bf16.msra.mxu0 %v1378
    %1399 = vmatprep.subr.bf16.mxu0 0
    %1400 = vmatpush1.bf16.msra.mxu0 %v1379
    %1401 = vmatprep.subr.bf16.mxu0 0
    %1402 = vmatpush1.bf16.msra.mxu0 %v1380
    %1403 = vmatprep.subr.bf16.mxu0 0
    %1404 = vmatpush1.bf16.msra.mxu0 %v1381
    %1405 = vmatprep.subr.bf16.mxu0 0
    %1406 = vmatpush1.bf16.msra.mxu0 %v1382
    %1407 = vmatprep.subr.bf16.mxu0 0
    %1408 = vmatpush1.bf16.msra.mxu0 0
    %1409 = vmatprep.subr.bf16.mxu0 0
    %1410 = vmatpush1.bf16.msra.mxu0 0
    %1411 = vmatprep.subr.bf16.mxu0 0
    %1412 = vmatpush1.bf16.msra.mxu0 0
    %1413 = vmatprep.subr.bf16.mxu0 0
    %1414 = vmatpush1.bf16.msra.mxu0 0
    %1415 = vmatprep.subr.bf16.mxu0 0
    %1416 = vmatpush1.bf16.msra.mxu0 0
    %1417 = vmatprep.subr.bf16.mxu0 0
    %1418 = vmatpush1.bf16.msra.mxu0 0
    %1419 = vmatprep.subr.bf16.mxu0 0
    %1420 = vmatpush1.bf16.msra.mxu0 0
    %1421 = vmatprep.subr.bf16.mxu0 0
    %1422 = vmatpush1.bf16.msra.mxu0 0
    %1423 = vmatprep.mubr.bf16.mxu0 0
    %1424 = vmatmul.mubr.bf16.gmra.mrb[0].mxu0 %v1322
    %v1425 = vpop.f32.mrb[0].mxu0
    %v1426 = vadd.f32 %v1342, %v1425
    %v1427 = vpop.f32.mrb[0].mxu0
    %v1428 = vpop.f32.mrb[0].mxu0
    %v1429 = vpop.f32.mrb[0].mxu0
    %1430 = vdwg.mxu0
    %v1431 = vmul.f32 %v1426, 0.2
    %v1432 = vmax.f32 %v1426, %v1431
    %1433 = vadd.xlane.f32.xlu0 %v1432
    %v1434 = vpop.xlane.xlu0 %1433
    %v1435 = vmul.f32 %v1434, %v1302
    %v1436 = vsub.f32 %v1432, %v1435
    %v1437 = vmul.f32 %v1436, %v1436
    %1438 = vadd.xlane.f32.xlu0 %v1437
    %v1439 = vpop.xlane.xlu0 %1438
    %v1440 = vmul.f32 %v1439, %v1302
    %v1441 = vadd.f32 %v1440, 1e-05
    %v1442 = vrsqrt.pop %v1441
    %v1443 = vmul.f32 %v1436, %v1442
    %v1444 = vlaneseq
    %v1445 = vshrl.u32 %v1444, 7
    %v1446 = vsub.s32 0, %v1445
    %v1447 = vrot.slane %v623, %v1446
    %v1448 = vmul.f32 %v1443, %v1447
    %v1449 = vlaneseq
    %v1450 = vshrl.u32 %v1449, 7
    %v1451 = vsub.s32 0, %v1450
    %v1452 = vrot.slane %v624, %v1451
    %v1453 = vadd.f32 %v1448, %v1452
    %v1454 = vmul.f32 %v1453, 0.1
    %v1455 = vadd.f32 %v1321, %v1454
    %v1456 = vpack.c.bf16 %v1455, %v1455
    %v1457 = vld [vmem:[#allocation12] sm:$0xf]
    %v1458 = vld [vmem:[#allocation12 + $0x4] sm:$0xf]
    %v1459 = vld [vmem:[#allocation12 + $0x8] sm:$0xf]
    %v1460 = vld [vmem:[#allocation12 + $0xc] sm:$0xf]
    %v1461 = vld [vmem:[#allocation12 + $0x10] sm:$0xf]
    %v1462 = vld [vmem:[#allocation12 + $0x14] sm:$0xf]
    %v1463 = vld [vmem:[#allocation12 + $0x18] sm:$0xf]
    %v1464 = vld [vmem:[#allocation12 + $0x1c] sm:$0xf]
    %v1465 = vld [vmem:[#allocation12 + $0x20] sm:$0xf]
    %v1466 = vld [vmem:[#allocation12 + $0x24] sm:$0xf]
    %v1467 = vld [vmem:[#allocation12 + $0x28] sm:$0xf]
    %v1468 = vld [vmem:[#allocation12 + $0x2c] sm:$0xf]
    %v1469 = vld [vmem:[#allocation12 + $0x30] sm:$0xf]
    %v1470 = vld [vmem:[#allocation12 + $0x34] sm:$0xf]
    %v1471 = vld [vmem:[#allocation12 + $0x38] sm:$0xf]
    %v1472 = vld [vmem:[#allocation12 + $0x3c] sm:$0xf]
    %v1473 = vlaneseq
    %v1474 = vshrl.u32 %v1473, 7
    %v1475 = vsub.s32 0, %v1474
    %v1476 = vrot.slane %v625, %v1475
    %v1493 = vunpack.c.l.b16 %v1457
    %v1494 = vunpack.c.l.b16 %v1458
    %v1495 = vunpack.c.l.b16 %v1459
    %v1496 = vunpack.c.l.b16 %v1460
    %v1497 = vunpack.c.l.b16 %v1461
    %v1498 = vunpack.c.l.b16 %v1462
    %v1499 = vunpack.c.l.b16 %v1463
    %v1500 = vunpack.c.l.b16 %v1464
    %v1501 = vunpack.c.l.b16 %v1465
    %v1502 = vunpack.c.l.b16 %v1466
    %v1503 = vunpack.c.l.b16 %v1467
    %v1504 = vunpack.c.l.b16 %v1468
    %v1505 = vunpack.c.l.b16 %v1469
    %v1506 = vunpack.c.l.b16 %v1470
    %v1507 = vunpack.c.l.b16 %v1471
    %v1508 = vunpack.c.l.b16 %v1472
    %v1509 = vpack.c.b16 %v1494, %v1493
    %v1510 = vpack.c.b16 %v1496, %v1495
    %v1511 = vpack.c.b16 %v1498, %v1497
    %v1512 = vpack.c.b16 %v1500, %v1499
    %v1513 = vpack.c.b16 %v1502, %v1501
    %v1514 = vpack.c.b16 %v1504, %v1503
    %v1515 = vpack.c.b16 %v1506, %v1505
    %v1516 = vpack.c.b16 %v1508, %v1507
    %1525 = vmatprep.subr.bf16.mxu0 0
    %1526 = vmatpush1.bf16.msra.mxu0 %v1509
    %1527 = vmatprep.subr.bf16.mxu0 0
    %1528 = vmatpush1.bf16.msra.mxu0 %v1510
    %1529 = vmatprep.subr.bf16.mxu0 0
    %1530 = vmatpush1.bf16.msra.mxu0 %v1511
    %1531 = vmatprep.subr.bf16.mxu0 0
    %1532 = vmatpush1.bf16.msra.mxu0 %v1512
    %1533 = vmatprep.subr.bf16.mxu0 0
    %1534 = vmatpush1.bf16.msra.mxu0 %v1513
    %1535 = vmatprep.subr.bf16.mxu0 0
    %1536 = vmatpush1.bf16.msra.mxu0 %v1514
    %1537 = vmatprep.subr.bf16.mxu0 0
    %1538 = vmatpush1.bf16.msra.mxu0 %v1515
    %1539 = vmatprep.subr.bf16.mxu0 0
    %1540 = vmatpush1.bf16.msra.mxu0 %v1516
    %1541 = vmatprep.subr.bf16.mxu0 0
    %1542 = vmatpush1.bf16.msra.mxu0 0
    %1543 = vmatprep.subr.bf16.mxu0 0
    %1544 = vmatpush1.bf16.msra.mxu0 0
    %1545 = vmatprep.subr.bf16.mxu0 0
    %1546 = vmatpush1.bf16.msra.mxu0 0
    %1547 = vmatprep.subr.bf16.mxu0 0
    %1548 = vmatpush1.bf16.msra.mxu0 0
    %1549 = vmatprep.subr.bf16.mxu0 0
    %1550 = vmatpush1.bf16.msra.mxu0 0
    %1551 = vmatprep.subr.bf16.mxu0 0
    %1552 = vmatpush1.bf16.msra.mxu0 0
    %1553 = vmatprep.subr.bf16.mxu0 0
    %1554 = vmatpush1.bf16.msra.mxu0 0
    %1555 = vmatprep.subr.bf16.mxu0 0
    %1556 = vmatpush1.bf16.msra.mxu0 0
    %1557 = vmatprep.mubr.bf16.mxu0 0
    %1558 = vmatmul.mubr.bf16.gmra.mrb[0].mxu0 %v1456
    %v1559 = vpop.f32.mrb[0].mxu0
    %v1560 = vadd.f32 %v1476, %v1559
    %v1561 = vpop.f32.mrb[0].mxu0
    %v1562 = vpop.f32.mrb[0].mxu0
    %v1563 = vpop.f32.mrb[0].mxu0
    %1564 = vdwg.mxu0
    %v1565 = vlaneseq
    %v1566 = vand.u32 %v1565, 127
    %vm1567 = vcmp.eq.s32.totalorder %v1566, 127
    %v1568 = vmul.f32 %v1560, 0.5
    %v1569 = vtanh.pop %v1568
    %v1570 = vadd.f32 %v1569, 1.0
    %v1571 = vmul.f32 %v1570, 0.5
    %v1572 = vsel %vm1567, %v1571, %v1560
    %1573 = vst [vmem:[%s11] sm:$0xff] %v1572
    // Predicated region
    $region74: #{discriminator_forward.1} parent=1 // pred_check
      _
    $region75: #{discriminator_forward.1} parent=1 // pred_check_branch
      %1575 = sbr.rel (0) target = $region77
    $region76: #{discriminator_forward.1} parent=1 // pred_region
      _
    $region77: #{discriminator_forward.1} parent=1 // pred_fallthru
      _
    // Predicated region
    $region78: #{discriminator_forward.1} parent=1 // pred_check
      _
    $region79: #{discriminator_forward.1} parent=1 // pred_check_branch
      %1577 = sbr.rel (0) target = $region81
    $region80: #{discriminator_forward.1} parent=1 // pred_region
      _
    $region81: #{discriminator_forward.1} parent=1 // pred_fallthru
      _
    %1578 = vsyncpa [#allocation3], 1
    %1579 = vsyncpa [#allocation5], 1
    %1580 = vsyncpa [#allocation8], 1
    %1581 = vsyncpa [#allocation11], 1

</llo_original>
